<compile_context>
chip_gen: v7x
topology: tpu7x:2x2x1
jax: 0.10.0
libtpu: 0.0.40
codegen_flags: <defaults>
</compile_context>

<pallas_src>
import functools
import math

import numpy as np
import jax
import jax.numpy as jnp
from jax.experimental import pallas as pl
from jax.experimental.pallas import tpu as pltpu

# ----------------------------- config (small) -------------------------------
INPUT_DIM = 4
OUTPUT_DIM = 8
PATCH_LEN = 4
STRIDE = 4
SEQ_LEN = 16
NUM_PATCHES = (SEQ_LEN - PATCH_LEN) // STRIDE + 1   # 4
D_MODEL = 32
NHEAD = 2
HEAD_DIM = D_MODEL // NHEAD                          # 16
DIM_FF = 64
BATCH = 2
LN_EPS = 1e-5
PATCH_FEAT = INPUT_DIM * PATCH_LEN                   # 16

# rows of the packed small-parameter array (each row padded to 128 lanes)
ROW_PE = 0                          # rows [0, NUM_PATCHES): positional encoding
ROW_BPROJ = NUM_PATCHES             # 4  : patch-embedding bias      (D lanes)
ROW_BIN = ROW_BPROJ + 1             # 5  : fused q/k/v bias          (3D lanes)
ROW_BO = ROW_BIN + 1                # 6  : out-proj bias             (D lanes)
ROW_LN1W = ROW_BO + 1               # 7
ROW_LN1B = ROW_LN1W + 1             # 8
ROW_B1 = ROW_LN1B + 1               # 9  : FFN bias 1                (DIM_FF lanes)
ROW_B2 = ROW_B1 + 1                 # 10 : FFN bias 2                (D lanes)
ROW_LN2W = ROW_B2 + 1               # 11
ROW_LN2B = ROW_LN2W + 1             # 12
ROW_BH = ROW_LN2B + 1               # 13 : head bias                 (OUT lanes)
SP_ROWS = 16                        # pad to full sublane multiple
SP_COLS = 128


# ------------------------------ kernel helpers ------------------------------
def _erf(z):
    # TODO(synk): exact lax.erf lowering support in Mosaic is uncertain; use
    # Abramowitz & Stegun 7.1.26 polynomial (|err| < 1.5e-7 ~ f32 eps) instead.
    a1, a2, a3, a4, a5 = 0.254829592, -0.284496736, 1.421413741, -1.453152027, 1.061405429
    p = 0.3275911
    za = jnp.abs(z)
    t = 1.0 / (1.0 + p * za)
    poly = ((((a5 * t + a4) * t + a3) * t + a2) * t + a1) * t
    r = 1.0 - poly * jnp.exp(-za * za)
    return jnp.where(z < 0.0, -r, r)


def _gelu(x):
    # exact (erf-based) GELU, matching torch F.gelu default
    return 0.5 * x * (1.0 + _erf(x * 0.7071067811865476))


def _layer_norm(x, w, b):
    mu = jnp.mean(x, axis=-1, keepdims=True)
    xc = x - mu
    var = jnp.mean(xc * xc, axis=-1, keepdims=True)
    return xc * jax.lax.rsqrt(var + LN_EPS) * w + b


# --------------------------------- kernel -----------------------------------
def patchtst_kernel(patch_ref, sp_ref, w_proj_ref, w_in_ref, wo_ref,
                    w1_ref, w2_ref, wh_ref, out_ref, *, bt):
    f32 = jnp.float32
    N, D, HD = NUM_PATCHES, D_MODEL, HEAD_DIM
    rows = bt * N

    # unpack the small-parameter block (static slices of one loaded value)
    sp = sp_ref[...]
    pe = sp[ROW_PE:ROW_PE + N, 0:D]
    b_proj = sp[ROW_BPROJ:ROW_BPROJ + 1, 0:D]
    b_in = sp[ROW_BIN:ROW_BIN + 1, 0:3 * D]
    bo = sp[ROW_BO:ROW_BO + 1, 0:D]
    ln1w = sp[ROW_LN1W:ROW_LN1W + 1, 0:D]
    ln1b = sp[ROW_LN1B:ROW_LN1B + 1, 0:D]
    b1 = sp[ROW_B1:ROW_B1 + 1, 0:DIM_FF]
    b2 = sp[ROW_B2:ROW_B2 + 1, 0:D]
    ln2w = sp[ROW_LN2W:ROW_LN2W + 1, 0:D]
    ln2b = sp[ROW_LN2B:ROW_LN2B + 1, 0:D]
    bh = sp[ROW_BH:ROW_BH + 1, 0:OUTPUT_DIM]

    # -- patch embedding + positional encoding (dropout = identity, eval mode)
    x = patch_ref[0]                                                   # (rows, C*P)
    x = jnp.dot(x, w_proj_ref[...], preferred_element_type=f32) + b_proj
    x = x + jnp.tile(pe, (bt, 1))                                      # (rows, D)

    # -- multi-head self-attention: fused QKV, fused output projection
    qkv = jnp.dot(x, w_in_ref[...], preferred_element_type=f32) + b_in  # (rows, 3D)
    scale = 1.0 / math.sqrt(HD)
    ctx_heads = []
    for h in range(NHEAD):
        q = qkv[:, h * HD:(h + 1) * HD].reshape(bt, N, HD)
        k = qkv[:, D + h * HD:D + (h + 1) * HD].reshape(bt, N, HD)
        v = qkv[:, 2 * D + h * HD:2 * D + (h + 1) * HD].reshape(bt, N, HD)
        s = jnp.einsum('bnd,bmd->bnm', q, k,
                       preferred_element_type=f32) * scale             # (bt, N, N)
        s = s - jnp.max(s, axis=-1, keepdims=True)
        e = jnp.exp(s)
        p = e * pl.reciprocal(jnp.sum(e, axis=-1, keepdims=True), approx=True)
        ctx_heads.append(
            jnp.einsum('bnm,bmd->bnd', p, v, preferred_element_type=f32))
    ctx = jnp.concatenate(ctx_heads, axis=-1).reshape(rows, D)          # (rows, D)
    attn = jnp.dot(ctx, wo_ref[...], preferred_element_type=f32) + bo
    x = _layer_norm(x + attn, ln1w, ln1b)

    # -- feed-forward (GELU), post-norm
    ff = _gelu(jnp.dot(x, w1_ref[...], preferred_element_type=f32) + b1)
    ff = jnp.dot(ff, w2_ref[...], preferred_element_type=f32) + b2
    x = _layer_norm(x + ff, ln2w, ln2b)

    # -- head: flatten (bt, N, D) -> (bt, N*D) via lane concat (patch-major,
    #    matches torch reshape order), then one (bt, N*D) x (N*D, OUT) matmul.
    x3 = x.reshape(bt, N, D)
    xf = jnp.concatenate([x3[:, n, :] for n in range(N)], axis=-1)      # (bt, N*D)
    out_ref[0] = jnp.dot(xf, wh_ref[...], preferred_element_type=f32) + bh


# -------------------------------- wrapper -----------------------------------
def _pick_batch_tile(B):
    # Fold as much batch as possible into each grid step (sublane density,
    # amortized per-step pipeline overhead), but keep >=2 'parallel' grid
    # steps when the batch allows so both TensorCores on a v7x chip get work.
    for bt in (8, 4, 2):
        if B % bt == 0 and B // bt >= 2:
            return bt
    return B  # tiny batch: fold everything into a single grid step


@jax.jit
def patchtst_forward(x, params):
    B = x.shape[0]
    BT = _pick_batch_tile(B)
    G = B // BT

    # -------- patch extraction (glue: transpose + unfold + permute + reshape)
    xt = jnp.transpose(x, (0, 2, 1))                                   # (B, C, L)
    idx = np.arange(NUM_PATCHES)[:, None] * STRIDE + np.arange(PATCH_LEN)[None, :]
    patches = xt[:, :, idx]                                            # (B, C, N, P)
    patches = jnp.transpose(patches, (0, 2, 1, 3)).reshape(
        B * NUM_PATCHES, PATCH_FEAT)                                   # (B*N, C*P)
    patches = patches.reshape(G, BT * NUM_PATCHES, PATCH_FEAT)

    p = params
    inputs = [patches, p['small'], p['w_proj'], p['w_in'], p['wo'],
              p['w1'], p['w2'], p['wh']]
    in_specs = [pl.BlockSpec((1, BT * NUM_PATCHES, PATCH_FEAT),
                             lambda g: (g, 0, 0))]
    in_specs += [pl.BlockSpec(a.shape, lambda g: (0, 0)) for a in inputs[1:]]

    out = pl.pallas_call(
        functools.partial(patchtst_kernel, bt=BT),
        out_shape=jax.ShapeDtypeStruct((G, BT, OUTPUT_DIM), jnp.float32),
        grid=(G,),
        in_specs=in_specs,
        out_specs=pl.BlockSpec((1, BT, OUTPUT_DIM), lambda g: (g, 0, 0)),
        compiler_params=pltpu.CompilerParams(
            dimension_semantics=("parallel",)),
    )(*inputs)
    return out.reshape(B, OUTPUT_DIM)


# --------------------------- deterministic params ---------------------------
def make_params():
    keys = jax.random.split(jax.random.PRNGKey(0), 16)

    def rnd(k, shape, scale=0.1):
        return (scale * jax.random.normal(k, shape)).astype(jnp.float32)

    D = D_MODEL

    # patch embedding (applied as x @ W)
    w_proj = rnd(keys[0], (PATCH_FEAT, D))
    b_proj = rnd(keys[1], (D,))

    # positional encoding buffer (first num_patches rows)
    position = np.arange(NUM_PATCHES, dtype=np.float32)[:, None]
    div_term = np.exp(np.arange(0, D, 2, dtype=np.float32) * (-math.log(10000.0) / D))
    pe = np.zeros((NUM_PATCHES, D), np.float32)
    pe[:, 0::2] = np.sin(position * div_term)
    pe[:, 1::2] = np.cos(position * div_term)

    # MHA: emulate PyTorch in_proj_weight (3D, D) / in_proj_bias (3D,),
    # applied as x @ in_proj_weight.T -> fused (D, 3D) right-multiplied weight.
    in_proj_w = rnd(keys[2], (3 * D, D))
    in_proj_b = rnd(keys[3], (3 * D,))
    w_in = in_proj_w.T                              # (D, 3D)
    b_in = in_proj_b                                # (3D,)

    out_w = rnd(keys[4], (D, D))                    # out_proj.weight
    wo = out_w.T                                    # concat(heads) @ out_w.T
    bo = rnd(keys[5], (D,))

    # layer norms
    ln1w = (1.0 + rnd(keys[6], (D,))).astype(jnp.float32)
    ln1b = rnd(keys[7], (D,))
    ln2w = (1.0 + rnd(keys[8], (D,))).astype(jnp.float32)
    ln2b = rnd(keys[9], (D,))

    # feed-forward
    w1 = rnd(keys[10], (D, DIM_FF))
    b1 = rnd(keys[11], (DIM_FF,))
    w2 = rnd(keys[12], (DIM_FF, D))
    b2 = rnd(keys[13], (D,))

    # head: PyTorch Linear(d_model*num_patches, output_dim); flatten order is
    # row-major (patch-major), which matches the in-kernel lane concat.
    head_w = rnd(keys[14], (OUTPUT_DIM, NUM_PATCHES * D))
    wh = head_w.T                                   # (N*D, OUT)
    bh = rnd(keys[15], (OUTPUT_DIM,))

    # pack all tiny vectors into one (16, 128) array -> single DMA stream
    sp = np.zeros((SP_ROWS, SP_COLS), np.float32)
    sp[ROW_PE:ROW_PE + NUM_PATCHES, 0:D] = pe
    sp[ROW_BPROJ, 0:D] = np.asarray(b_proj)
    sp[ROW_BIN, 0:3 * D] = np.asarray(b_in)
    sp[ROW_BO, 0:D] = np.asarray(bo)
    sp[ROW_LN1W, 0:D] = np.asarray(ln1w)
    sp[ROW_LN1B, 0:D] = np.asarray(ln1b)
    sp[ROW_B1, 0:DIM_FF] = np.asarray(b1)
    sp[ROW_B2, 0:D] = np.asarray(b2)
    sp[ROW_LN2W, 0:D] = np.asarray(ln2w)
    sp[ROW_LN2B, 0:D] = np.asarray(ln2b)
    sp[ROW_BH, 0:OUTPUT_DIM] = np.asarray(bh)

    return dict(w_proj=w_proj,
                w_in=jnp.asarray(w_in),
                wo=jnp.asarray(wo),
                w1=w1, w2=w2,
                wh=jnp.asarray(wh),
                small=jnp.asarray(sp))


if __name__ == "__main__":
    key = jax.random.PRNGKey(0)
    x = jax.random.normal(key, (BATCH, SEQ_LEN, INPUT_DIM), dtype=jnp.float32)
    params = make_params()
    y = patchtst_forward(x, params)
    jax.block_until_ready(y)
    assert y.shape == (BATCH, OUTPUT_DIM)
    print("KERNEL_OK")
</pallas_src>

<mosaic_0001>
module attributes {stable_mosaic.version = 11 : i64} {
  func.func @patchtst_kernel(%arg0: i32, %arg1: memref<1x8x16xf32, #tpu.memory_space<vmem>>, %arg2: memref<16x128xf32, #tpu.memory_space<vmem>>, %arg3: memref<16x32xf32, #tpu.memory_space<vmem>>, %arg4: memref<32x96xf32, #tpu.memory_space<vmem>>, %arg5: memref<32x32xf32, #tpu.memory_space<vmem>>, %arg6: memref<32x64xf32, #tpu.memory_space<vmem>>, %arg7: memref<64x32xf32, #tpu.memory_space<vmem>>, %arg8: memref<128x8xf32, #tpu.memory_space<vmem>>, %arg9: memref<1x2x8xf32, #tpu.memory_space<vmem>>) attributes {dimension_semantics = [#tpu.dimension_semantics<parallel>], iteration_bounds = array<i64: 1>, scalar_prefetch = 0 : i64, scratch_operands = 0 : i64, tpu.core_type = #tpu.core_type<tc>, window_params = [{transform_indices = @transform_0, window_bounds = array<i64: 1, 8, 16>}, {pipeline_mode = #tpu.pipeline_mode<synchronous>, transform_indices = @transform_1, window_bounds = array<i64: 16, 128>}, {pipeline_mode = #tpu.pipeline_mode<synchronous>, transform_indices = @transform_2, window_bounds = array<i64: 16, 32>}, {pipeline_mode = #tpu.pipeline_mode<synchronous>, transform_indices = @transform_3, window_bounds = array<i64: 32, 96>}, {pipeline_mode = #tpu.pipeline_mode<synchronous>, transform_indices = @transform_4, window_bounds = array<i64: 32, 32>}, {pipeline_mode = #tpu.pipeline_mode<synchronous>, transform_indices = @transform_5, window_bounds = array<i64: 32, 64>}, {pipeline_mode = #tpu.pipeline_mode<synchronous>, transform_indices = @transform_6, window_bounds = array<i64: 64, 32>}, {pipeline_mode = #tpu.pipeline_mode<synchronous>, transform_indices = @transform_7, window_bounds = array<i64: 128, 8>}, {transform_indices = @transform_8, window_bounds = array<i64: 1, 2, 8>}]} {
    %c0 = arith.constant 0 : index
    %c0_0 = arith.constant 0 : index
    %0 = vector.load %arg2[%c0, %c0_0] : memref<16x128xf32, #tpu.memory_space<vmem>>, vector<16x128xf32>
    %1 = vector.extract_strided_slice %0 {offsets = [0, 0], sizes = [4, 32], strides = [1, 1]} : vector<16x128xf32> to vector<4x32xf32>
    %2 = vector.extract_strided_slice %0 {offsets = [4, 0], sizes = [1, 32], strides = [1, 1]} : vector<16x128xf32> to vector<1x32xf32>
    %3 = vector.extract_strided_slice %0 {offsets = [5, 0], sizes = [1, 96], strides = [1, 1]} : vector<16x128xf32> to vector<1x96xf32>
    %4 = vector.extract_strided_slice %0 {offsets = [6, 0], sizes = [1, 32], strides = [1, 1]} : vector<16x128xf32> to vector<1x32xf32>
    %5 = vector.extract_strided_slice %0 {offsets = [7, 0], sizes = [1, 32], strides = [1, 1]} : vector<16x128xf32> to vector<1x32xf32>
    %6 = vector.extract_strided_slice %0 {offsets = [8, 0], sizes = [1, 32], strides = [1, 1]} : vector<16x128xf32> to vector<1x32xf32>
    %7 = vector.extract_strided_slice %0 {offsets = [9, 0], sizes = [1, 64], strides = [1, 1]} : vector<16x128xf32> to vector<1x64xf32>
    %8 = vector.extract_strided_slice %0 {offsets = [10, 0], sizes = [1, 32], strides = [1, 1]} : vector<16x128xf32> to vector<1x32xf32>
    %9 = vector.extract_strided_slice %0 {offsets = [11, 0], sizes = [1, 32], strides = [1, 1]} : vector<16x128xf32> to vector<1x32xf32>
    %10 = vector.extract_strided_slice %0 {offsets = [12, 0], sizes = [1, 32], strides = [1, 1]} : vector<16x128xf32> to vector<1x32xf32>
    %11 = vector.extract_strided_slice %0 {offsets = [13, 0], sizes = [1, 8], strides = [1, 1]} : vector<16x128xf32> to vector<1x8xf32>
    %c0_1 = arith.constant 0 : index
    %c0_2 = arith.constant 0 : index
    %c0_3 = arith.constant 0 : index
    %12 = vector.load %arg1[%c0_1, %c0_2, %c0_3] : memref<1x8x16xf32, #tpu.memory_space<vmem>>, vector<1x8x16xf32>
    %13 = vector.shape_cast %12 : vector<1x8x16xf32> to vector<8x16xf32>
    %c0_4 = arith.constant 0 : index
    %c0_5 = arith.constant 0 : index
    %14 = vector.load %arg3[%c0_4, %c0_5] : memref<16x32xf32, #tpu.memory_space<vmem>>, vector<16x32xf32>
    %cst = arith.constant dense<0.000000e+00> : vector<8x32xf32>
    %15 = tpu.matmul %13, %14, %cst {dimension_numbers = #tpu.dot_dimension_numbers<[1], [0], [0], [1], [0, 0, 1, 1], [], []>} : vector<8x16xf32>, vector<16x32xf32>, vector<8x32xf32> -> vector<8x32xf32>
    %16 = vector.broadcast %2 : vector<1x32xf32> to vector<8x32xf32>
    %17 = arith.addf %15, %16 : vector<8x32xf32>
    %18 = tpu.concatenate %1, %1 in 0 : vector<4x32xf32>, vector<4x32xf32> -> vector<8x32xf32>
    %19 = arith.addf %17, %18 : vector<8x32xf32>
    %c0_6 = arith.constant 0 : index
    %c0_7 = arith.constant 0 : index
    %20 = vector.load %arg4[%c0_6, %c0_7] : memref<32x96xf32, #tpu.memory_space<vmem>>, vector<32x96xf32>
    %cst_8 = arith.constant dense<0.000000e+00> : vector<8x96xf32>
    %21 = tpu.matmul %19, %20, %cst_8 {dimension_numbers = #tpu.dot_dimension_numbers<[1], [0], [0], [1], [0, 0, 1, 1], [], []>} : vector<8x32xf32>, vector<32x96xf32>, vector<8x96xf32> -> vector<8x96xf32>
    %22 = vector.broadcast %3 : vector<1x96xf32> to vector<8x96xf32>
    %23 = arith.addf %21, %22 : vector<8x96xf32>
    %24 = vector.extract_strided_slice %23 {offsets = [0, 0], sizes = [8, 16], strides = [1, 1]} : vector<8x96xf32> to vector<8x16xf32>
    %25 = vector.shape_cast %24 : vector<8x16xf32> to vector<2x4x16xf32>
    %26 = vector.extract_strided_slice %23 {offsets = [0, 32], sizes = [8, 16], strides = [1, 1]} : vector<8x96xf32> to vector<8x16xf32>
    %27 = vector.shape_cast %26 : vector<8x16xf32> to vector<2x4x16xf32>
    %28 = vector.extract_strided_slice %23 {offsets = [0, 64], sizes = [8, 16], strides = [1, 1]} : vector<8x96xf32> to vector<8x16xf32>
    %29 = vector.shape_cast %28 : vector<8x16xf32> to vector<2x4x16xf32>
    "tpu.trace_start"() <{level = 10 : i32, message = "bnd,bmd->bnm"}> : () -> ()
    %cst_9 = arith.constant dense<0.000000e+00> : vector<2x4x4xf32>
    %30 = tpu.matmul %25, %27, %cst_9 {dimension_numbers = #tpu.dot_dimension_numbers<[2], [2], [1], [1], [0, 0, 0, 1, 1, 1], [0], [0]>} : vector<2x4x16xf32>, vector<2x4x16xf32>, vector<2x4x4xf32> -> vector<2x4x4xf32>
    "tpu.trace_stop"() : () -> ()
    %cst_10 = arith.constant 2.500000e-01 : f32
    %31 = vector.broadcast %cst_10 : f32 to vector<2x4x4xf32>
    %32 = arith.mulf %30, %31 : vector<2x4x4xf32>
    %cst_11 = arith.constant dense<0xFF800000> : vector<2x4xf32>
    %33 = vector.multi_reduction <maximumf>, %32, %cst_11 [2] : vector<2x4x4xf32> to vector<2x4xf32>
    %34 = vector.shape_cast %33 : vector<2x4xf32> to vector<2x4x1xf32>
    %35 = vector.broadcast %34 : vector<2x4x1xf32> to vector<2x4x4xf32>
    %36 = arith.subf %32, %35 : vector<2x4x4xf32>
    %37 = math.exp %36 : vector<2x4x4xf32>
    %cst_12 = arith.constant dense<0.000000e+00> : vector<2x4xf32>
    %38 = vector.multi_reduction <add>, %37, %cst_12 [2] : vector<2x4x4xf32> to vector<2x4xf32>
    %39 = vector.shape_cast %38 : vector<2x4xf32> to vector<2x4x1xf32>
    %40 = tpu.reciprocal %39 {approx = true} : vector<2x4x1xf32> -> vector<2x4x1xf32>
    %41 = vector.broadcast %40 : vector<2x4x1xf32> to vector<2x4x4xf32>
    %42 = arith.mulf %37, %41 : vector<2x4x4xf32>
    "tpu.trace_start"() <{level = 10 : i32, message = "bnm,bmd->bnd"}> : () -> ()
    %cst_13 = arith.constant dense<0.000000e+00> : vector<2x4x16xf32>
    %43 = tpu.matmul %42, %29, %cst_13 {dimension_numbers = #tpu.dot_dimension_numbers<[2], [1], [1], [2], [0, 0, 0, 1, 1, 2], [0], [0]>} : vector<2x4x4xf32>, vector<2x4x16xf32>, vector<2x4x16xf32> -> vector<2x4x16xf32>
    "tpu.trace_stop"() : () -> ()
    %44 = vector.extract_strided_slice %23 {offsets = [0, 16], sizes = [8, 16], strides = [1, 1]} : vector<8x96xf32> to vector<8x16xf32>
    %45 = vector.shape_cast %44 : vector<8x16xf32> to vector<2x4x16xf32>
    %46 = vector.extract_strided_slice %23 {offsets = [0, 48], sizes = [8, 16], strides = [1, 1]} : vector<8x96xf32> to vector<8x16xf32>
    %47 = vector.shape_cast %46 : vector<8x16xf32> to vector<2x4x16xf32>
    %48 = vector.extract_strided_slice %23 {offsets = [0, 80], sizes = [8, 16], strides = [1, 1]} : vector<8x96xf32> to vector<8x16xf32>
    %49 = vector.shape_cast %48 : vector<8x16xf32> to vector<2x4x16xf32>
    "tpu.trace_start"() <{level = 10 : i32, message = "bnd,bmd->bnm"}> : () -> ()
    %cst_14 = arith.constant dense<0.000000e+00> : vector<2x4x4xf32>
    %50 = tpu.matmul %45, %47, %cst_14 {dimension_numbers = #tpu.dot_dimension_numbers<[2], [2], [1], [1], [0, 0, 0, 1, 1, 1], [0], [0]>} : vector<2x4x16xf32>, vector<2x4x16xf32>, vector<2x4x4xf32> -> vector<2x4x4xf32>
    "tpu.trace_stop"() : () -> ()
    %cst_15 = arith.constant 2.500000e-01 : f32
    %51 = vector.broadcast %cst_15 : f32 to vector<2x4x4xf32>
    %52 = arith.mulf %50, %51 : vector<2x4x4xf32>
    %cst_16 = arith.constant dense<0xFF800000> : vector<2x4xf32>
    %53 = vector.multi_reduction <maximumf>, %52, %cst_16 [2] : vector<2x4x4xf32> to vector<2x4xf32>
    %54 = vector.shape_cast %53 : vector<2x4xf32> to vector<2x4x1xf32>
    %55 = vector.broadcast %54 : vector<2x4x1xf32> to vector<2x4x4xf32>
    %56 = arith.subf %52, %55 : vector<2x4x4xf32>
    %57 = math.exp %56 : vector<2x4x4xf32>
    %cst_17 = arith.constant dense<0.000000e+00> : vector<2x4xf32>
    %58 = vector.multi_reduction <add>, %57, %cst_17 [2] : vector<2x4x4xf32> to vector<2x4xf32>
    %59 = vector.shape_cast %58 : vector<2x4xf32> to vector<2x4x1xf32>
    %60 = tpu.reciprocal %59 {approx = true} : vector<2x4x1xf32> -> vector<2x4x1xf32>
    %61 = vector.broadcast %60 : vector<2x4x1xf32> to vector<2x4x4xf32>
    %62 = arith.mulf %57, %61 : vector<2x4x4xf32>
    "tpu.trace_start"() <{level = 10 : i32, message = "bnm,bmd->bnd"}> : () -> ()
    %cst_18 = arith.constant dense<0.000000e+00> : vector<2x4x16xf32>
    %63 = tpu.matmul %62, %49, %cst_18 {dimension_numbers = #tpu.dot_dimension_numbers<[2], [1], [1], [2], [0, 0, 0, 1, 1, 2], [0], [0]>} : vector<2x4x4xf32>, vector<2x4x16xf32>, vector<2x4x16xf32> -> vector<2x4x16xf32>
    "tpu.trace_stop"() : () -> ()
    %64 = tpu.concatenate %43, %63 in 2 : vector<2x4x16xf32>, vector<2x4x16xf32> -> vector<2x4x32xf32>
    %65 = vector.shape_cast %64 : vector<2x4x32xf32> to vector<8x32xf32>
    %c0_19 = arith.constant 0 : index
    %c0_20 = arith.constant 0 : index
    %66 = vector.load %arg5[%c0_19, %c0_20] : memref<32x32xf32, #tpu.memory_space<vmem>>, vector<32x32xf32>
    %cst_21 = arith.constant dense<0.000000e+00> : vector<8x32xf32>
    %67 = tpu.matmul %65, %66, %cst_21 {dimension_numbers = #tpu.dot_dimension_numbers<[1], [0], [0], [1], [0, 0, 1, 1], [], []>} : vector<8x32xf32>, vector<32x32xf32>, vector<8x32xf32> -> vector<8x32xf32>
    %68 = vector.broadcast %4 : vector<1x32xf32> to vector<8x32xf32>
    %69 = arith.addf %67, %68 : vector<8x32xf32>
    %70 = arith.addf %19, %69 : vector<8x32xf32>
    %cst_22 = arith.constant dense<0.000000e+00> : vector<8xf32>
    %71 = vector.multi_reduction <add>, %70, %cst_22 [1] : vector<8x32xf32> to vector<8xf32>
    %72 = vector.shape_cast %71 : vector<8xf32> to vector<8x1xf32>
    %cst_23 = arith.constant 3.200000e+01 : f32
    %73 = vector.broadcast %cst_23 : f32 to vector<8x1xf32>
    %74 = arith.divf %72, %73 : vector<8x1xf32>
    %75 = vector.broadcast %74 : vector<8x1xf32> to vector<8x32xf32>
    %76 = arith.subf %70, %75 : vector<8x32xf32>
    %77 = arith.mulf %76, %76 : vector<8x32xf32>
    %cst_24 = arith.constant dense<0.000000e+00> : vector<8xf32>
    %78 = vector.multi_reduction <add>, %77, %cst_24 [1] : vector<8x32xf32> to vector<8xf32>
    %79 = vector.shape_cast %78 : vector<8xf32> to vector<8x1xf32>
    %cst_25 = arith.constant 3.200000e+01 : f32
    %80 = vector.broadcast %cst_25 : f32 to vector<8x1xf32>
    %81 = arith.divf %79, %80 : vector<8x1xf32>
    %cst_26 = arith.constant 9.99999974E-6 : f32
    %82 = vector.broadcast %cst_26 : f32 to vector<8x1xf32>
    %83 = arith.addf %81, %82 : vector<8x1xf32>
    %84 = math.rsqrt %83 : vector<8x1xf32>
    %85 = vector.broadcast %84 : vector<8x1xf32> to vector<8x32xf32>
    %86 = arith.mulf %76, %85 : vector<8x32xf32>
    %87 = vector.broadcast %5 : vector<1x32xf32> to vector<8x32xf32>
    %88 = arith.mulf %86, %87 : vector<8x32xf32>
    %89 = vector.broadcast %6 : vector<1x32xf32> to vector<8x32xf32>
    %90 = arith.addf %88, %89 : vector<8x32xf32>
    %c0_27 = arith.constant 0 : index
    %c0_28 = arith.constant 0 : index
    %91 = vector.load %arg6[%c0_27, %c0_28] : memref<32x64xf32, #tpu.memory_space<vmem>>, vector<32x64xf32>
    %cst_29 = arith.constant dense<0.000000e+00> : vector<8x64xf32>
    %92 = tpu.matmul %90, %91, %cst_29 {dimension_numbers = #tpu.dot_dimension_numbers<[1], [0], [0], [1], [0, 0, 1, 1], [], []>} : vector<8x32xf32>, vector<32x64xf32>, vector<8x64xf32> -> vector<8x64xf32>
    %93 = vector.broadcast %7 : vector<1x64xf32> to vector<8x64xf32>
    %94 = arith.addf %92, %93 : vector<8x64xf32>
    %cst_30 = arith.constant 5.000000e-01 : f32
    %95 = vector.broadcast %cst_30 : f32 to vector<8x64xf32>
    %96 = arith.mulf %95, %94 : vector<8x64xf32>
    %cst_31 = arith.constant 0.707106769 : f32
    %97 = vector.broadcast %cst_31 : f32 to vector<8x64xf32>
    %98 = arith.mulf %94, %97 : vector<8x64xf32>
    %99 = math.absf %98 : vector<8x64xf32>
    %cst_32 = arith.constant 0.327591091 : f32
    %100 = vector.broadcast %cst_32 : f32 to vector<8x64xf32>
    %101 = arith.mulf %100, %99 : vector<8x64xf32>
    %cst_33 = arith.constant 1.000000e+00 : f32
    %102 = vector.broadcast %cst_33 : f32 to vector<8x64xf32>
    %103 = arith.addf %102, %101 : vector<8x64xf32>
    %cst_34 = arith.constant 1.000000e+00 : f32
    %104 = vector.broadcast %cst_34 : f32 to vector<8x64xf32>
    %105 = arith.divf %104, %103 : vector<8x64xf32>
    %cst_35 = arith.constant 1.06140542 : f32
    %106 = vector.broadcast %cst_35 : f32 to vector<8x64xf32>
    %107 = arith.mulf %106, %105 : vector<8x64xf32>
    %cst_36 = arith.constant -1.45315206 : f32
    %108 = vector.broadcast %cst_36 : f32 to vector<8x64xf32>
    %109 = arith.addf %107, %108 : vector<8x64xf32>
    %110 = arith.mulf %109, %105 : vector<8x64xf32>
    %cst_37 = arith.constant 1.42141378 : f32
    %111 = vector.broadcast %cst_37 : f32 to vector<8x64xf32>
    %112 = arith.addf %110, %111 : vector<8x64xf32>
    %113 = arith.mulf %112, %105 : vector<8x64xf32>
    %cst_38 = arith.constant -0.284496725 : f32
    %114 = vector.broadcast %cst_38 : f32 to vector<8x64xf32>
    %115 = arith.addf %113, %114 : vector<8x64xf32>
    %116 = arith.mulf %115, %105 : vector<8x64xf32>
    %cst_39 = arith.constant 0.254829586 : f32
    %117 = vector.broadcast %cst_39 : f32 to vector<8x64xf32>
    %118 = arith.addf %116, %117 : vector<8x64xf32>
    %119 = arith.mulf %118, %105 : vector<8x64xf32>
    %cst_40 = arith.constant 0.000000e+00 : f32
    %120 = vector.broadcast %cst_40 : f32 to vector<8x64xf32>
    %121 = arith.subf %120, %99 : vector<8x64xf32>
    %122 = arith.mulf %121, %99 : vector<8x64xf32>
    %123 = math.exp %122 : vector<8x64xf32>
    %124 = arith.mulf %119, %123 : vector<8x64xf32>
    %cst_41 = arith.constant 1.000000e+00 : f32
    %125 = vector.broadcast %cst_41 : f32 to vector<8x64xf32>
    %126 = arith.subf %125, %124 : vector<8x64xf32>
    %cst_42 = arith.constant 0.000000e+00 : f32
    %127 = vector.broadcast %cst_42 : f32 to vector<8x64xf32>
    %128 = arith.cmpf olt, %98, %127 : vector<8x64xf32>
    %cst_43 = arith.constant 0.000000e+00 : f32
    %129 = vector.broadcast %cst_43 : f32 to vector<8x64xf32>
    %130 = arith.subf %129, %126 : vector<8x64xf32>
    %131 = arith.select %128, %130, %126 : vector<8x64xi1>, vector<8x64xf32>
    %cst_44 = arith.constant 1.000000e+00 : f32
    %132 = vector.broadcast %cst_44 : f32 to vector<8x64xf32>
    %133 = arith.addf %132, %131 : vector<8x64xf32>
    %134 = arith.mulf %96, %133 : vector<8x64xf32>
    %c0_45 = arith.constant 0 : index
    %c0_46 = arith.constant 0 : index
    %135 = vector.load %arg7[%c0_45, %c0_46] : memref<64x32xf32, #tpu.memory_space<vmem>>, vector<64x32xf32>
    %cst_47 = arith.constant dense<0.000000e+00> : vector<8x32xf32>
    %136 = tpu.matmul %134, %135, %cst_47 {dimension_numbers = #tpu.dot_dimension_numbers<[1], [0], [0], [1], [0, 0, 1, 1], [], []>} : vector<8x64xf32>, vector<64x32xf32>, vector<8x32xf32> -> vector<8x32xf32>
    %137 = vector.broadcast %8 : vector<1x32xf32> to vector<8x32xf32>
    %138 = arith.addf %136, %137 : vector<8x32xf32>
    %139 = arith.addf %90, %138 : vector<8x32xf32>
    %cst_48 = arith.constant dense<0.000000e+00> : vector<8xf32>
    %140 = vector.multi_reduction <add>, %139, %cst_48 [1] : vector<8x32xf32> to vector<8xf32>
    %141 = vector.shape_cast %140 : vector<8xf32> to vector<8x1xf32>
    %cst_49 = arith.constant 3.200000e+01 : f32
    %142 = vector.broadcast %cst_49 : f32 to vector<8x1xf32>
    %143 = arith.divf %141, %142 : vector<8x1xf32>
    %144 = vector.broadcast %143 : vector<8x1xf32> to vector<8x32xf32>
    %145 = arith.subf %139, %144 : vector<8x32xf32>
    %146 = arith.mulf %145, %145 : vector<8x32xf32>
    %cst_50 = arith.constant dense<0.000000e+00> : vector<8xf32>
    %147 = vector.multi_reduction <add>, %146, %cst_50 [1] : vector<8x32xf32> to vector<8xf32>
    %148 = vector.shape_cast %147 : vector<8xf32> to vector<8x1xf32>
    %cst_51 = arith.constant 3.200000e+01 : f32
    %149 = vector.broadcast %cst_51 : f32 to vector<8x1xf32>
    %150 = arith.divf %148, %149 : vector<8x1xf32>
    %cst_52 = arith.constant 9.99999974E-6 : f32
    %151 = vector.broadcast %cst_52 : f32 to vector<8x1xf32>
    %152 = arith.addf %150, %151 : vector<8x1xf32>
    %153 = math.rsqrt %152 : vector<8x1xf32>
    %154 = vector.broadcast %153 : vector<8x1xf32> to vector<8x32xf32>
    %155 = arith.mulf %145, %154 : vector<8x32xf32>
    %156 = vector.broadcast %9 : vector<1x32xf32> to vector<8x32xf32>
    %157 = arith.mulf %155, %156 : vector<8x32xf32>
    %158 = vector.broadcast %10 : vector<1x32xf32> to vector<8x32xf32>
    %159 = arith.addf %157, %158 : vector<8x32xf32>
    %160 = vector.shape_cast %159 : vector<8x32xf32> to vector<2x4x32xf32>
    %161 = vector.extract_strided_slice %160 {offsets = [0, 0, 0], sizes = [2, 1, 32], strides = [1, 1, 1]} : vector<2x4x32xf32> to vector<2x1x32xf32>
    %162 = vector.shape_cast %161 : vector<2x1x32xf32> to vector<2x32xf32>
    %163 = vector.extract_strided_slice %160 {offsets = [0, 1, 0], sizes = [2, 1, 32], strides = [1, 1, 1]} : vector<2x4x32xf32> to vector<2x1x32xf32>
    %164 = vector.shape_cast %163 : vector<2x1x32xf32> to vector<2x32xf32>
    %165 = vector.extract_strided_slice %160 {offsets = [0, 2, 0], sizes = [2, 1, 32], strides = [1, 1, 1]} : vector<2x4x32xf32> to vector<2x1x32xf32>
    %166 = vector.shape_cast %165 : vector<2x1x32xf32> to vector<2x32xf32>
    %167 = vector.extract_strided_slice %160 {offsets = [0, 3, 0], sizes = [2, 1, 32], strides = [1, 1, 1]} : vector<2x4x32xf32> to vector<2x1x32xf32>
    %168 = vector.shape_cast %167 : vector<2x1x32xf32> to vector<2x32xf32>
    %169 = tpu.concatenate %162, %164, %166, %168 in 1 : vector<2x32xf32>, vector<2x32xf32>, vector<2x32xf32>, vector<2x32xf32> -> vector<2x128xf32>
    %c0_53 = arith.constant 0 : index
    %c0_54 = arith.constant 0 : index
    %170 = vector.load %arg8[%c0_53, %c0_54] : memref<128x8xf32, #tpu.memory_space<vmem>>, vector<128x8xf32>
    %cst_55 = arith.constant dense<0.000000e+00> : vector<2x8xf32>
    %171 = tpu.matmul %169, %170, %cst_55 {dimension_numbers = #tpu.dot_dimension_numbers<[1], [0], [0], [1], [0, 0, 1, 1], [], []>} : vector<2x128xf32>, vector<128x8xf32>, vector<2x8xf32> -> vector<2x8xf32>
    %172 = vector.broadcast %11 : vector<1x8xf32> to vector<2x8xf32>
    %173 = arith.addf %171, %172 : vector<2x8xf32>
    %c0_56 = arith.constant 0 : index
    %c0_57 = arith.constant 0 : index
    %c0_58 = arith.constant 0 : index
    %174 = vector.load %arg9[%c0_56, %c0_57, %c0_58] : memref<1x2x8xf32, #tpu.memory_space<vmem>>, vector<1x2x8xf32>
    %175 = vector.shape_cast %174 : vector<1x2x8xf32> to vector<2x8xf32>
    %176 = vector.shape_cast %173 : vector<2x8xf32> to vector<1x2x8xf32>
    tpu.vector_store %arg9[%c0_56, %c0_57, %c0_58], %176 {strides = array<i32>} : memref<1x2x8xf32, #tpu.memory_space<vmem>>, vector<1x2x8xf32>,
    return
  }
  func.func @transform_0(%arg0: i32) -> (i32, i32, i32) {
    %c0_i32 = arith.constant 0 : i32
    %c0_i32_0 = arith.constant 0 : i32
    %c0_i32_1 = arith.constant 0 : i32
    return %arg0, %c0_i32, %c0_i32_0 : i32, i32, i32
  }
  func.func @transform_1(%arg0: i32) -> (i32, i32) {
    %c0_i32 = arith.constant 0 : i32
    %c0_i32_0 = arith.constant 0 : i32
    %c0_i32_1 = arith.constant 0 : i32
    return %c0_i32, %c0_i32_0 : i32, i32
  }
  func.func @transform_2(%arg0: i32) -> (i32, i32) {
    %c0_i32 = arith.constant 0 : i32
    %c0_i32_0 = arith.constant 0 : i32
    %c0_i32_1 = arith.constant 0 : i32
    return %c0_i32, %c0_i32_0 : i32, i32
  }
  func.func @transform_3(%arg0: i32) -> (i32, i32) {
    %c0_i32 = arith.constant 0 : i32
    %c0_i32_0 = arith.constant 0 : i32
    %c0_i32_1 = arith.constant 0 : i32
    return %c0_i32, %c0_i32_0 : i32, i32
  }
  func.func @transform_4(%arg0: i32) -> (i32, i32) {
    %c0_i32 = arith.constant 0 : i32
    %c0_i32_0 = arith.constant 0 : i32
    %c0_i32_1 = arith.constant 0 : i32
    return %c0_i32, %c0_i32_0 : i32, i32
  }
  func.func @transform_5(%arg0: i32) -> (i32, i32) {
    %c0_i32 = arith.constant 0 : i32
    %c0_i32_0 = arith.constant 0 : i32
    %c0_i32_1 = arith.constant 0 : i32
    return %c0_i32, %c0_i32_0 : i32, i32
  }
  func.func @transform_6(%arg0: i32) -> (i32, i32) {
    %c0_i32 = arith.constant 0 : i32
    %c0_i32_0 = arith.constant 0 : i32
    %c0_i32_1 = arith.constant 0 : i32
    return %c0_i32, %c0_i32_0 : i32, i32
  }
  func.func @transform_7(%arg0: i32) -> (i32, i32) {
    %c0_i32 = arith.constant 0 : i32
    %c0_i32_0 = arith.constant 0 : i32
    %c0_i32_1 = arith.constant 0 : i32
    return %c0_i32, %c0_i32_0 : i32, i32
  }
  func.func @transform_8(%arg0: i32) -> (i32, i32, i32) {
    %c0_i32 = arith.constant 0 : i32
    %c0_i32_0 = arith.constant 0 : i32
    %c0_i32_1 = arith.constant 0 : i32
    return %arg0, %c0_i32, %c0_i32_0 : i32, i32, i32
  }
}

</mosaic_0001>

<llo_original>
// kernel: patchtst_forward.1
$region0: #{patchtst_forward.1}
  #allocation0 [shape = 'u32[]', space=smem, size = 0x4, offset = 0x4, fixed_abs, tag = 'smem constant byte address 0x4 - core index']
  #allocation1 [shape = 'u32[144,128]{1,0:T(1,128)}', space=vmem, size = 0x12000, scoped, tag = 'internal scratch']
  %s0 = inlined_call_operand.vmem [shape: f32[1,8,16], index: 0, kind: input, shape index: {}]
  %s1 = inlined_call_operand.vmem [shape: f32[16,128], index: 1, kind: input, shape index: {}]
  %s2 = inlined_call_operand.vmem [shape: f32[16,32], index: 2, kind: input, shape index: {}]
  %s3 = inlined_call_operand.vmem [shape: f32[32,96], index: 3, kind: input, shape index: {}]
  %s4 = inlined_call_operand.vmem [shape: f32[32,32], index: 4, kind: input, shape index: {}]
  %s5 = inlined_call_operand.vmem [shape: f32[32,64], index: 5, kind: input, shape index: {}]
  %s6 = inlined_call_operand.vmem [shape: f32[64,32], index: 6, kind: input, shape index: {}]
  %s7 = inlined_call_operand.vmem [shape: f32[128,8], index: 7, kind: input, shape index: {}]
  %s8 = inlined_call_operand.hbm [shape: f32[1,2,8], index: 8, kind: output, shape index: {}]
  %s9 = sld [smem:[#allocation0]]
  $region42: #{patchtst_forward.1} parent=0
    _
  %s11 = ssub.s32 1, %s9
  %s12 = scalar_select 0, %s11, %s9
  $region1: #{patchtst_forward.1} parent=0
    #allocation2 [shape = 'u8[1024]{0}', space=vmem, size = 0x400, scoped, tag = 'output window, operand 0, single buffered']
    #allocation3 [shape = 's32[1]{0}', space=sflag, size = 0x4, scoped, tag = 'scoped memory for patchtst_forward.1']
    %13 = vsyncpa [#allocation3], 0
    // Predicated region
    $region2: #{patchtst_forward.1} parent=1 // pred_check
      _
    $region3: #{patchtst_forward.1} parent=1 // pred_check_branch
      %15 = sbr.rel (0) target = $region5
    $region4: #{patchtst_forward.1} parent=1 // pred_region
      _
    $region5: #{patchtst_forward.1} parent=1 // pred_fallthru
      _
    // Predicated region
    $region6: #{patchtst_forward.1} parent=1 // pred_check
      _
    $region7: #{patchtst_forward.1} parent=1 // pred_check_branch
      %17 = sbr.rel (0) target = $region9
    $region8: #{patchtst_forward.1} parent=1 // pred_region
      _
    $region9: #{patchtst_forward.1} parent=1 // pred_fallthru
      _
    // Predicated region
    $region10: #{patchtst_forward.1} parent=1 // pred_check
      _
    $region11: #{patchtst_forward.1} parent=1 // pred_check_branch
      %19 = sbr.rel (0) target = $region13
    $region12: #{patchtst_forward.1} parent=1 // pred_region
      _
    $region13: #{patchtst_forward.1} parent=1 // pred_fallthru
      _
    // Predicated region
    $region14: #{patchtst_forward.1} parent=1 // pred_check
      _
    $region15: #{patchtst_forward.1} parent=1 // pred_check_branch
      %21 = sbr.rel (0) target = $region17
    $region16: #{patchtst_forward.1} parent=1 // pred_region
      _
    $region17: #{patchtst_forward.1} parent=1 // pred_fallthru
      _
    // Predicated region
    $region18: #{patchtst_forward.1} parent=1 // pred_check
      _
    $region19: #{patchtst_forward.1} parent=1 // pred_check_branch
      %23 = sbr.rel (0) target = $region21
    $region20: #{patchtst_forward.1} parent=1 // pred_region
      _
    $region21: #{patchtst_forward.1} parent=1 // pred_fallthru
      _
    // Predicated region
    $region22: #{patchtst_forward.1} parent=1 // pred_check
      _
    $region23: #{patchtst_forward.1} parent=1 // pred_check_branch
      %25 = sbr.rel (0) target = $region25
    $region24: #{patchtst_forward.1} parent=1 // pred_region
      _
    $region25: #{patchtst_forward.1} parent=1 // pred_fallthru
      _
    // Predicated region
    $region26: #{patchtst_forward.1} parent=1 // pred_check
      _
    $region27: #{patchtst_forward.1} parent=1 // pred_check_branch
      %27 = sbr.rel (0) target = $region29
    $region28: #{patchtst_forward.1} parent=1 // pred_region
      _
    $region29: #{patchtst_forward.1} parent=1 // pred_fallthru
      _
    // Predicated region
    $region30: #{patchtst_forward.1} parent=1 // pred_check
      _
    $region31: #{patchtst_forward.1} parent=1 // pred_check_branch
      %29 = sbr.rel (0) target = $region33
    $region32: #{patchtst_forward.1} parent=1 // pred_region
      _
    $region33: #{patchtst_forward.1} parent=1 // pred_fallthru
      _
    %v30 = vld [vmem:[%s1] sm:$0xff]
    %v31 = vld [vmem:[%s1 + $0x8] sm:$0xff]
    %v32 = vld [vmem:[%s0] sm:$0xff]
    %v33 = vld [vmem:[%s2] sm:$0xff]
    %v34 = vld [vmem:[%s2 + $0x8] sm:$0xff]
    %v35 = vlaneseq
    %v36 = vshrl.u32 %v35, 7
    %v37 = vsub.s32 4, %v36
    %v38 = vrot.slane %v30, %v37
    %vm39 = vcmask 130048
    %v41 = vsel %vm39, %v32, 0
    %43 = vmatprep.subr.mxu0 0.0
    %44 = vmatpush1.msra.mxu0 %v33
    %45 = vmatprep.subr.mxu0 0.0
    %46 = vmatpush1.msra.mxu0 %v34
    %47 = vmatprep.subr.mxu0 0.0
    %48 = vmatpush1.msra.mxu0 0.0
    %49 = vmatprep.subr.mxu0 0.0
    %50 = vmatpush1.msra.mxu0 0.0
    %51 = vmatprep.subr.mxu0 0.0
    %52 = vmatpush1.msra.mxu0 0.0
    %53 = vmatprep.subr.mxu0 0.0
    %54 = vmatpush1.msra.mxu0 0.0
    %55 = vmatprep.subr.mxu0 0.0
    %56 = vmatpush1.msra.mxu0 0.0
    %57 = vmatprep.subr.mxu0 0.0
    %58 = vmatpush1.msra.mxu0 0.0
    %59 = vmatprep.subr.mxu0 0.0
    %60 = vmatpush1.msra.mxu0 0.0
    %61 = vmatprep.subr.mxu0 0.0
    %62 = vmatpush1.msra.mxu0 0.0
    %63 = vmatprep.subr.mxu0 0.0
    %64 = vmatpush1.msra.mxu0 0.0
    %65 = vmatprep.subr.mxu0 0.0
    %66 = vmatpush1.msra.mxu0 0.0
    %67 = vmatprep.subr.mxu0 0.0
    %68 = vmatpush1.msra.mxu0 0.0
    %69 = vmatprep.subr.mxu0 0.0
    %70 = vmatpush1.msra.mxu0 0.0
    %71 = vmatprep.subr.mxu0 0.0
    %72 = vmatpush1.msra.mxu0 0.0
    %73 = vmatprep.subr.mxu0 0.0
    %74 = vmatpush1.msra.mxu0 0.0
    %75 = vmatprep.subr.mxu0 0.0
    %76 = vmatpush1.msra.mxu0 0.0
    %77 = vmatprep.subr.mxu0 0.0
    %78 = vmatpush1.msra.mxu0 0.0
    %79 = vmatprep.subr.mxu0 0.0
    %80 = vmatpush1.msra.mxu0 0.0
    %81 = vmatprep.subr.mxu0 0.0
    %82 = vmatpush1.msra.mxu0 0.0
    %83 = vmatprep.subr.mxu0 0.0
    %84 = vmatpush1.msra.mxu0 0.0
    %85 = vmatprep.subr.mxu0 0.0
    %86 = vmatpush1.msra.mxu0 0.0
    %87 = vmatprep.subr.mxu0 0.0
    %88 = vmatpush1.msra.mxu0 0.0
    %89 = vmatprep.subr.mxu0 0.0
    %90 = vmatpush1.msra.mxu0 0.0
    %91 = vmatprep.subr.mxu0 0.0
    %92 = vmatpush1.msra.mxu0 0.0
    %93 = vmatprep.subr.mxu0 0.0
    %94 = vmatpush1.msra.mxu0 0.0
    %95 = vmatprep.subr.mxu0 0.0
    %96 = vmatpush1.msra.mxu0 0.0
    %97 = vmatprep.subr.mxu0 0.0
    %98 = vmatpush1.msra.mxu0 0.0
    %99 = vmatprep.subr.mxu0 0.0
    %100 = vmatpush1.msra.mxu0 0.0
    %101 = vmatprep.subr.mxu0 0.0
    %102 = vmatpush1.msra.mxu0 0.0
    %103 = vmatprep.subr.mxu0 0.0
    %104 = vmatpush1.msra.mxu0 0.0
    %105 = vmatprep.subr.mxu0 0.0
    %106 = vmatpush1.msra.mxu0 0.0
    %107 = vmatprep.mubr.f32.mxu0 0.0
    %108 = vmatmul.mubr.f32.gmra.mrb[0].mxu0 %v41
    %v109 = vpop.f32.mrb[0].mxu0
    %v110 = vadd.f32 %v38, %v109
    %v111 = vpop.f32.mrb[0].mxu0
    %112 = vdwg.mxu0
    %v114 = vrot.slane %v30, 4
    %vm116 = vcmask 1043456
    %v117 = vsel %vm116, %v30, %v114
    %v118 = vadd.f32 %v110, %v117
    %v119 = vld [vmem:[%s3] sm:$0xff]
    %v120 = vld [vmem:[%s3 + $0x8] sm:$0xff]
    %v121 = vld [vmem:[%s3 + $0x10] sm:$0xff]
    %v122 = vld [vmem:[%s3 + $0x18] sm:$0xff]
    %v123 = vlaneseq
    %v124 = vshrl.u32 %v123, 7
    %v125 = vsub.s32 5, %v124
    %v126 = vrot.slane %v30, %v125
    %vm127 = vcmask 261120
    %v129 = vsel %vm127, %v118, 0
    %131 = vmatprep.subr.mxu0 0.0
    %132 = vmatpush1.msra.mxu0 %v119
    %133 = vmatprep.subr.mxu0 0.0
    %134 = vmatpush1.msra.mxu0 %v120
    %135 = vmatprep.subr.mxu0 0.0
    %136 = vmatpush1.msra.mxu0 %v121
    %137 = vmatprep.subr.mxu0 0.0
    %138 = vmatpush1.msra.mxu0 %v122
    %139 = vmatprep.subr.mxu0 0.0
    %140 = vmatpush1.msra.mxu0 0.0
    %141 = vmatprep.subr.mxu0 0.0
    %142 = vmatpush1.msra.mxu0 0.0
    %143 = vmatprep.subr.mxu0 0.0
    %144 = vmatpush1.msra.mxu0 0.0
    %145 = vmatprep.subr.mxu0 0.0
    %146 = vmatpush1.msra.mxu0 0.0
    %147 = vmatprep.subr.mxu0 0.0
    %148 = vmatpush1.msra.mxu0 0.0
    %149 = vmatprep.subr.mxu0 0.0
    %150 = vmatpush1.msra.mxu0 0.0
    %151 = vmatprep.subr.mxu0 0.0
    %152 = vmatpush1.msra.mxu0 0.0
    %153 = vmatprep.subr.mxu0 0.0
    %154 = vmatpush1.msra.mxu0 0.0
    %155 = vmatprep.subr.mxu0 0.0
    %156 = vmatpush1.msra.mxu0 0.0
    %157 = vmatprep.subr.mxu0 0.0
    %158 = vmatpush1.msra.mxu0 0.0
    %159 = vmatprep.subr.mxu0 0.0
    %160 = vmatpush1.msra.mxu0 0.0
    %161 = vmatprep.subr.mxu0 0.0
    %162 = vmatpush1.msra.mxu0 0.0
    %163 = vmatprep.subr.mxu0 0.0
    %164 = vmatpush1.msra.mxu0 0.0
    %165 = vmatprep.subr.mxu0 0.0
    %166 = vmatpush1.msra.mxu0 0.0
    %167 = vmatprep.subr.mxu0 0.0
    %168 = vmatpush1.msra.mxu0 0.0
    %169 = vmatprep.subr.mxu0 0.0
    %170 = vmatpush1.msra.mxu0 0.0
    %171 = vmatprep.subr.mxu0 0.0
    %172 = vmatpush1.msra.mxu0 0.0
    %173 = vmatprep.subr.mxu0 0.0
    %174 = vmatpush1.msra.mxu0 0.0
    %175 = vmatprep.subr.mxu0 0.0
    %176 = vmatpush1.msra.mxu0 0.0
    %177 = vmatprep.subr.mxu0 0.0
    %178 = vmatpush1.msra.mxu0 0.0
    %179 = vmatprep.subr.mxu0 0.0
    %180 = vmatpush1.msra.mxu0 0.0
    %181 = vmatprep.subr.mxu0 0.0
    %182 = vmatpush1.msra.mxu0 0.0
    %183 = vmatprep.subr.mxu0 0.0
    %184 = vmatpush1.msra.mxu0 0.0
    %185 = vmatprep.subr.mxu0 0.0
    %186 = vmatpush1.msra.mxu0 0.0
    %187 = vmatprep.subr.mxu0 0.0
    %188 = vmatpush1.msra.mxu0 0.0
    %189 = vmatprep.subr.mxu0 0.0
    %190 = vmatpush1.msra.mxu0 0.0
    %191 = vmatprep.subr.mxu0 0.0
    %192 = vmatpush1.msra.mxu0 0.0
    %193 = vmatprep.subr.mxu0 0.0
    %194 = vmatpush1.msra.mxu0 0.0
    %195 = vmatprep.mubr.f32.mxu0 0.0
    %196 = vmatmul.mubr.f32.gmra.mrb[0].mxu0 %v129
    %v197 = vpop.f32.mrb[0].mxu0
    %v198 = vadd.f32 %v126, %v197
    %v199 = vpop.f32.mrb[0].mxu0
    %200 = vdwg.mxu0
    %v202 = vcombine.high %v198, %v198
    %203 = vrot.lane.b32.xlu0 %v198, 96
    %v204 = vpop.permute.xlu0 %203
    %v205 = vsel %vm39, %v198, 0
    %v207 = vsel %vm39, %v204, 0
    %209 = vmatprep.subr.mxu0 0.0
    %210 = vmatpush1.xpose.msra.mxu0 %v207
    %211 = vmatprep.subr.mxu0 0.0
    %212 = vmatpush1.xpose.msra.mxu0 0.0
    %213 = vmatprep.subr.mxu0 0.0
    %214 = vmatpush1.xpose.msra.mxu0 0.0
    %215 = vmatprep.subr.mxu0 0.0
    %216 = vmatpush1.xpose.msra.mxu0 0.0
    %217 = vmatprep.subr.mxu0 0.0
    %218 = vmatpush1.xpose.msra.mxu0 0.0
    %219 = vmatprep.subr.mxu0 0.0
    %220 = vmatpush1.xpose.msra.mxu0 0.0
    %221 = vmatprep.subr.mxu0 0.0
    %222 = vmatpush1.xpose.msra.mxu0 0.0
    %223 = vmatprep.subr.mxu0 0.0
    %224 = vmatpush1.xpose.msra.mxu0 0.0
    %225 = vmatprep.subr.mxu0 0.0
    %226 = vmatpush1.xpose.msra.mxu0 0.0
    %227 = vmatprep.subr.mxu0 0.0
    %228 = vmatpush1.xpose.msra.mxu0 0.0
    %229 = vmatprep.subr.mxu0 0.0
    %230 = vmatpush1.xpose.msra.mxu0 0.0
    %231 = vmatprep.subr.mxu0 0.0
    %232 = vmatpush1.xpose.msra.mxu0 0.0
    %233 = vmatprep.subr.mxu0 0.0
    %234 = vmatpush1.xpose.msra.mxu0 0.0
    %235 = vmatprep.subr.mxu0 0.0
    %236 = vmatpush1.xpose.msra.mxu0 0.0
    %237 = vmatprep.subr.mxu0 0.0
    %238 = vmatpush1.xpose.msra.mxu0 0.0
    %239 = vmatprep.subr.mxu0 0.0
    %240 = vmatpush1.xpose.msra.mxu0 0.0
    %241 = vmatprep.subr.mxu0 0.0
    %242 = vmatpush1.xpose.msra.mxu0 0.0
    %243 = vmatprep.subr.mxu0 0.0
    %244 = vmatpush1.xpose.msra.mxu0 0.0
    %245 = vmatprep.subr.mxu0 0.0
    %246 = vmatpush1.xpose.msra.mxu0 0.0
    %247 = vmatprep.subr.mxu0 0.0
    %248 = vmatpush1.xpose.msra.mxu0 0.0
    %249 = vmatprep.subr.mxu0 0.0
    %250 = vmatpush1.xpose.msra.mxu0 0.0
    %251 = vmatprep.subr.mxu0 0.0
    %252 = vmatpush1.xpose.msra.mxu0 0.0
    %253 = vmatprep.subr.mxu0 0.0
    %254 = vmatpush1.xpose.msra.mxu0 0.0
    %255 = vmatprep.subr.mxu0 0.0
    %256 = vmatpush1.xpose.msra.mxu0 0.0
    %257 = vmatprep.subr.mxu0 0.0
    %258 = vmatpush1.xpose.msra.mxu0 0.0
    %259 = vmatprep.subr.mxu0 0.0
    %260 = vmatpush1.xpose.msra.mxu0 0.0
    %261 = vmatprep.subr.mxu0 0.0
    %262 = vmatpush1.xpose.msra.mxu0 0.0
    %263 = vmatprep.subr.mxu0 0.0
    %264 = vmatpush1.xpose.msra.mxu0 0.0
    %265 = vmatprep.subr.mxu0 0.0
    %266 = vmatpush1.xpose.msra.mxu0 0.0
    %267 = vmatprep.subr.mxu0 0.0
    %268 = vmatpush1.xpose.msra.mxu0 0.0
    %269 = vmatprep.subr.mxu0 0.0
    %270 = vmatpush1.xpose.msra.mxu0 0.0
    %271 = vmatprep.subr.mxu0 0.0
    %272 = vmatpush1.xpose.msra.mxu0 0.0
    %273 = vmatprep.mubr.f32.mxu0 0.0
    %274 = vmatmul.mubr.f32.gmra.mrb[0].mxu0 %v205
    %v275 = vpop.f32.mrb[0].mxu0
    %v276 = vadd.f32 0.0, %v275
    %v277 = vpop.f32.mrb[0].mxu0
    %278 = vdwg.mxu0
    %279 = vrot.lane.b32.xlu0 %v202, 96
    %v280 = vpop.permute.xlu0 %279
    %v281 = vsel %vm39, %v202, 0
    %v283 = vsel %vm39, %v280, 0
    %285 = vmatprep.subr.mxu0 0.0
    %286 = vmatpush1.xpose.msra.mxu0 %v283
    %287 = vmatprep.subr.mxu0 0.0
    %288 = vmatpush1.xpose.msra.mxu0 0.0
    %289 = vmatprep.subr.mxu0 0.0
    %290 = vmatpush1.xpose.msra.mxu0 0.0
    %291 = vmatprep.subr.mxu0 0.0
    %292 = vmatpush1.xpose.msra.mxu0 0.0
    %293 = vmatprep.subr.mxu0 0.0
    %294 = vmatpush1.xpose.msra.mxu0 0.0
    %295 = vmatprep.subr.mxu0 0.0
    %296 = vmatpush1.xpose.msra.mxu0 0.0
    %297 = vmatprep.subr.mxu0 0.0
    %298 = vmatpush1.xpose.msra.mxu0 0.0
    %299 = vmatprep.subr.mxu0 0.0
    %300 = vmatpush1.xpose.msra.mxu0 0.0
    %301 = vmatprep.subr.mxu0 0.0
    %302 = vmatpush1.xpose.msra.mxu0 0.0
    %303 = vmatprep.subr.mxu0 0.0
    %304 = vmatpush1.xpose.msra.mxu0 0.0
    %305 = vmatprep.subr.mxu0 0.0
    %306 = vmatpush1.xpose.msra.mxu0 0.0
    %307 = vmatprep.subr.mxu0 0.0
    %308 = vmatpush1.xpose.msra.mxu0 0.0
    %309 = vmatprep.subr.mxu0 0.0
    %310 = vmatpush1.xpose.msra.mxu0 0.0
    %311 = vmatprep.subr.mxu0 0.0
    %312 = vmatpush1.xpose.msra.mxu0 0.0
    %313 = vmatprep.subr.mxu0 0.0
    %314 = vmatpush1.xpose.msra.mxu0 0.0
    %315 = vmatprep.subr.mxu0 0.0
    %316 = vmatpush1.xpose.msra.mxu0 0.0
    %317 = vmatprep.subr.mxu0 0.0
    %318 = vmatpush1.xpose.msra.mxu0 0.0
    %319 = vmatprep.subr.mxu0 0.0
    %320 = vmatpush1.xpose.msra.mxu0 0.0
    %321 = vmatprep.subr.mxu0 0.0
    %322 = vmatpush1.xpose.msra.mxu0 0.0
    %323 = vmatprep.subr.mxu0 0.0
    %324 = vmatpush1.xpose.msra.mxu0 0.0
    %325 = vmatprep.subr.mxu0 0.0
    %326 = vmatpush1.xpose.msra.mxu0 0.0
    %327 = vmatprep.subr.mxu0 0.0
    %328 = vmatpush1.xpose.msra.mxu0 0.0
    %329 = vmatprep.subr.mxu0 0.0
    %330 = vmatpush1.xpose.msra.mxu0 0.0
    %331 = vmatprep.subr.mxu0 0.0
    %332 = vmatpush1.xpose.msra.mxu0 0.0
    %333 = vmatprep.subr.mxu0 0.0
    %334 = vmatpush1.xpose.msra.mxu0 0.0
    %335 = vmatprep.subr.mxu0 0.0
    %336 = vmatpush1.xpose.msra.mxu0 0.0
    %337 = vmatprep.subr.mxu0 0.0
    %338 = vmatpush1.xpose.msra.mxu0 0.0
    %339 = vmatprep.subr.mxu0 0.0
    %340 = vmatpush1.xpose.msra.mxu0 0.0
    %341 = vmatprep.subr.mxu0 0.0
    %342 = vmatpush1.xpose.msra.mxu0 0.0
    %343 = vmatprep.subr.mxu0 0.0
    %344 = vmatpush1.xpose.msra.mxu0 0.0
    %345 = vmatprep.subr.mxu0 0.0
    %346 = vmatpush1.xpose.msra.mxu0 0.0
    %347 = vmatprep.subr.mxu0 0.0
    %348 = vmatpush1.xpose.msra.mxu0 0.0
    %349 = vmatprep.mubr.f32.mxu0 0.0
    %350 = vmatmul.mubr.f32.gmra.mrb[0].mxu0 %v281
    %v351 = vpop.f32.mrb[0].mxu0
    %v352 = vadd.f32 0.0, %v351
    %v353 = vpop.f32.mrb[0].mxu0
    %354 = vdwg.mxu0
    %v355 = vmul.f32 %v276, 0.25
    %v356 = vmul.f32 %v352, 0.25
    %vm357 = vcmask 27648
    %v358 = vsel %vm357, %v355, -inf
    %359 = vmax.xlane.f32.xlu0 %v358
    %v360 = vpop.xlane.xlu0 %359
    %v361 = vsel %vm357, %v356, -inf
    %362 = vmax.xlane.f32.xlu0 %v361
    %v363 = vpop.xlane.xlu0 %362
    %v364 = vsub.f32 %v355, %v360
    %v365 = vsub.f32 %v356, %v363
    %v366 = vmul.f32 %v364, 1.442695
    %v367 = vpow.pop %v366
    %v368 = vmul.f32 %v365, 1.442695
    %v369 = vpow.pop %v368
    %v370 = vsel %vm357, %v367, 0.0
    %371 = vadd.xlane.f32.xlu0 %v370
    %v372 = vpop.xlane.xlu0 %371
    %v373 = vsel %vm357, %v369, 0.0
    %374 = vadd.xlane.f32.xlu0 %v373
    %v375 = vpop.xlane.xlu0 %374
    %v376 = vrcp.pop %v372
    %v377 = vrcp.pop %v375
    %v378 = vmul.f32 %v367, %v376
    %v379 = vmul.f32 %v369, %v377
    %380 = vrot.lane.b32.xlu0 %v198, 64
    %v381 = vpop.permute.xlu0 %380
    %vm382 = vcmask 31744
    %v384 = vsel %vm382, %v378, 0
    %v386 = vsel %vm116, %v381, 0
    %388 = vmatprep.subr.mxu0 0.0
    %389 = vmatpush1.msra.mxu0 %v386
    %390 = vmatprep.subr.mxu0 0.0
    %391 = vmatpush1.msra.mxu0 0.0
    %392 = vmatprep.subr.mxu0 0.0
    %393 = vmatpush1.msra.mxu0 0.0
    %394 = vmatprep.subr.mxu0 0.0
    %395 = vmatpush1.msra.mxu0 0.0
    %396 = vmatprep.subr.mxu0 0.0
    %397 = vmatpush1.msra.mxu0 0.0
    %398 = vmatprep.subr.mxu0 0.0
    %399 = vmatpush1.msra.mxu0 0.0
    %400 = vmatprep.subr.mxu0 0.0
    %401 = vmatpush1.msra.mxu0 0.0
    %402 = vmatprep.subr.mxu0 0.0
    %403 = vmatpush1.msra.mxu0 0.0
    %404 = vmatprep.subr.mxu0 0.0
    %405 = vmatpush1.msra.mxu0 0.0
    %406 = vmatprep.subr.mxu0 0.0
    %407 = vmatpush1.msra.mxu0 0.0
    %408 = vmatprep.subr.mxu0 0.0
    %409 = vmatpush1.msra.mxu0 0.0
    %410 = vmatprep.subr.mxu0 0.0
    %411 = vmatpush1.msra.mxu0 0.0
    %412 = vmatprep.subr.mxu0 0.0
    %413 = vmatpush1.msra.mxu0 0.0
    %414 = vmatprep.subr.mxu0 0.0
    %415 = vmatpush1.msra.mxu0 0.0
    %416 = vmatprep.subr.mxu0 0.0
    %417 = vmatpush1.msra.mxu0 0.0
    %418 = vmatprep.subr.mxu0 0.0
    %419 = vmatpush1.msra.mxu0 0.0
    %420 = vmatprep.subr.mxu0 0.0
    %421 = vmatpush1.msra.mxu0 0.0
    %422 = vmatprep.subr.mxu0 0.0
    %423 = vmatpush1.msra.mxu0 0.0
    %424 = vmatprep.subr.mxu0 0.0
    %425 = vmatpush1.msra.mxu0 0.0
    %426 = vmatprep.subr.mxu0 0.0
    %427 = vmatpush1.msra.mxu0 0.0
    %428 = vmatprep.subr.mxu0 0.0
    %429 = vmatpush1.msra.mxu0 0.0
    %430 = vmatprep.subr.mxu0 0.0
    %431 = vmatpush1.msra.mxu0 0.0
    %432 = vmatprep.subr.mxu0 0.0
    %433 = vmatpush1.msra.mxu0 0.0
    %434 = vmatprep.subr.mxu0 0.0
    %435 = vmatpush1.msra.mxu0 0.0
    %436 = vmatprep.subr.mxu0 0.0
    %437 = vmatpush1.msra.mxu0 0.0
    %438 = vmatprep.subr.mxu0 0.0
    %439 = vmatpush1.msra.mxu0 0.0
    %440 = vmatprep.subr.mxu0 0.0
    %441 = vmatpush1.msra.mxu0 0.0
    %442 = vmatprep.subr.mxu0 0.0
    %443 = vmatpush1.msra.mxu0 0.0
    %444 = vmatprep.subr.mxu0 0.0
    %445 = vmatpush1.msra.mxu0 0.0
    %446 = vmatprep.subr.mxu0 0.0
    %447 = vmatpush1.msra.mxu0 0.0
    %448 = vmatprep.subr.mxu0 0.0
    %449 = vmatpush1.msra.mxu0 0.0
    %450 = vmatprep.subr.mxu0 0.0
    %451 = vmatpush1.msra.mxu0 0.0
    %452 = vmatprep.mubr.f32.mxu0 0.0
    %453 = vmatmul.mubr.f32.gmra.mrb[0].mxu0 %v384
    %v454 = vpop.f32.mrb[0].mxu0
    %v455 = vadd.f32 0.0, %v454
    %v456 = vpop.f32.mrb[0].mxu0
    %457 = vdwg.mxu0
    %458 = vrot.lane.b32.xlu0 %v202, 64
    %v459 = vpop.permute.xlu0 %458
    %v461 = vsel %vm382, %v379, 0
    %v463 = vsel %vm116, %v459, 0
    %465 = vmatprep.subr.mxu0 0.0
    %466 = vmatpush1.msra.mxu0 %v463
    %467 = vmatprep.subr.mxu0 0.0
    %468 = vmatpush1.msra.mxu0 0.0
    %469 = vmatprep.subr.mxu0 0.0
    %470 = vmatpush1.msra.mxu0 0.0
    %471 = vmatprep.subr.mxu0 0.0
    %472 = vmatpush1.msra.mxu0 0.0
    %473 = vmatprep.subr.mxu0 0.0
    %474 = vmatpush1.msra.mxu0 0.0
    %475 = vmatprep.subr.mxu0 0.0
    %476 = vmatpush1.msra.mxu0 0.0
    %477 = vmatprep.subr.mxu0 0.0
    %478 = vmatpush1.msra.mxu0 0.0
    %479 = vmatprep.subr.mxu0 0.0
    %480 = vmatpush1.msra.mxu0 0.0
    %481 = vmatprep.subr.mxu0 0.0
    %482 = vmatpush1.msra.mxu0 0.0
    %483 = vmatprep.subr.mxu0 0.0
    %484 = vmatpush1.msra.mxu0 0.0
    %485 = vmatprep.subr.mxu0 0.0
    %486 = vmatpush1.msra.mxu0 0.0
    %487 = vmatprep.subr.mxu0 0.0
    %488 = vmatpush1.msra.mxu0 0.0
    %489 = vmatprep.subr.mxu0 0.0
    %490 = vmatpush1.msra.mxu0 0.0
    %491 = vmatprep.subr.mxu0 0.0
    %492 = vmatpush1.msra.mxu0 0.0
    %493 = vmatprep.subr.mxu0 0.0
    %494 = vmatpush1.msra.mxu0 0.0
    %495 = vmatprep.subr.mxu0 0.0
    %496 = vmatpush1.msra.mxu0 0.0
    %497 = vmatprep.subr.mxu0 0.0
    %498 = vmatpush1.msra.mxu0 0.0
    %499 = vmatprep.subr.mxu0 0.0
    %500 = vmatpush1.msra.mxu0 0.0
    %501 = vmatprep.subr.mxu0 0.0
    %502 = vmatpush1.msra.mxu0 0.0
    %503 = vmatprep.subr.mxu0 0.0
    %504 = vmatpush1.msra.mxu0 0.0
    %505 = vmatprep.subr.mxu0 0.0
    %506 = vmatpush1.msra.mxu0 0.0
    %507 = vmatprep.subr.mxu0 0.0
    %508 = vmatpush1.msra.mxu0 0.0
    %509 = vmatprep.subr.mxu0 0.0
    %510 = vmatpush1.msra.mxu0 0.0
    %511 = vmatprep.subr.mxu0 0.0
    %512 = vmatpush1.msra.mxu0 0.0
    %513 = vmatprep.subr.mxu0 0.0
    %514 = vmatpush1.msra.mxu0 0.0
    %515 = vmatprep.subr.mxu0 0.0
    %516 = vmatpush1.msra.mxu0 0.0
    %517 = vmatprep.subr.mxu0 0.0
    %518 = vmatpush1.msra.mxu0 0.0
    %519 = vmatprep.subr.mxu0 0.0
    %520 = vmatpush1.msra.mxu0 0.0
    %521 = vmatprep.subr.mxu0 0.0
    %522 = vmatpush1.msra.mxu0 0.0
    %523 = vmatprep.subr.mxu0 0.0
    %524 = vmatpush1.msra.mxu0 0.0
    %525 = vmatprep.subr.mxu0 0.0
    %526 = vmatpush1.msra.mxu0 0.0
    %527 = vmatprep.subr.mxu0 0.0
    %528 = vmatpush1.msra.mxu0 0.0
    %529 = vmatprep.mubr.f32.mxu0 0.0
    %530 = vmatmul.mubr.f32.gmra.mrb[0].mxu0 %v461
    %v531 = vpop.f32.mrb[0].mxu0
    %v532 = vadd.f32 0.0, %v531
    %v533 = vpop.f32.mrb[0].mxu0
    %534 = vdwg.mxu0
    %535 = vrot.lane.b32.xlu0 %v198, 112
    %v536 = vpop.permute.xlu0 %535
    %537 = vrot.lane.b32.xlu0 %v198, 80
    %v538 = vpop.permute.xlu0 %537
    %v539 = vsel %vm39, %v536, 0
    %v541 = vsel %vm39, %v538, 0
    %543 = vmatprep.subr.mxu0 0.0
    %544 = vmatpush1.xpose.msra.mxu0 %v541
    %545 = vmatprep.subr.mxu0 0.0
    %546 = vmatpush1.xpose.msra.mxu0 0.0
    %547 = vmatprep.subr.mxu0 0.0
    %548 = vmatpush1.xpose.msra.mxu0 0.0
    %549 = vmatprep.subr.mxu0 0.0
    %550 = vmatpush1.xpose.msra.mxu0 0.0
    %551 = vmatprep.subr.mxu0 0.0
    %552 = vmatpush1.xpose.msra.mxu0 0.0
    %553 = vmatprep.subr.mxu0 0.0
    %554 = vmatpush1.xpose.msra.mxu0 0.0
    %555 = vmatprep.subr.mxu0 0.0
    %556 = vmatpush1.xpose.msra.mxu0 0.0
    %557 = vmatprep.subr.mxu0 0.0
    %558 = vmatpush1.xpose.msra.mxu0 0.0
    %559 = vmatprep.subr.mxu0 0.0
    %560 = vmatpush1.xpose.msra.mxu0 0.0
    %561 = vmatprep.subr.mxu0 0.0
    %562 = vmatpush1.xpose.msra.mxu0 0.0
    %563 = vmatprep.subr.mxu0 0.0
    %564 = vmatpush1.xpose.msra.mxu0 0.0
    %565 = vmatprep.subr.mxu0 0.0
    %566 = vmatpush1.xpose.msra.mxu0 0.0
    %567 = vmatprep.subr.mxu0 0.0
    %568 = vmatpush1.xpose.msra.mxu0 0.0
    %569 = vmatprep.subr.mxu0 0.0
    %570 = vmatpush1.xpose.msra.mxu0 0.0
    %571 = vmatprep.subr.mxu0 0.0
    %572 = vmatpush1.xpose.msra.mxu0 0.0
    %573 = vmatprep.subr.mxu0 0.0
    %574 = vmatpush1.xpose.msra.mxu0 0.0
    %575 = vmatprep.subr.mxu0 0.0
    %576 = vmatpush1.xpose.msra.mxu0 0.0
    %577 = vmatprep.subr.mxu0 0.0
    %578 = vmatpush1.xpose.msra.mxu0 0.0
    %579 = vmatprep.subr.mxu0 0.0
    %580 = vmatpush1.xpose.msra.mxu0 0.0
    %581 = vmatprep.subr.mxu0 0.0
    %582 = vmatpush1.xpose.msra.mxu0 0.0
    %583 = vmatprep.subr.mxu0 0.0
    %584 = vmatpush1.xpose.msra.mxu0 0.0
    %585 = vmatprep.subr.mxu0 0.0
    %586 = vmatpush1.xpose.msra.mxu0 0.0
    %587 = vmatprep.subr.mxu0 0.0
    %588 = vmatpush1.xpose.msra.mxu0 0.0
    %589 = vmatprep.subr.mxu0 0.0
    %590 = vmatpush1.xpose.msra.mxu0 0.0
    %591 = vmatprep.subr.mxu0 0.0
    %592 = vmatpush1.xpose.msra.mxu0 0.0
    %593 = vmatprep.subr.mxu0 0.0
    %594 = vmatpush1.xpose.msra.mxu0 0.0
    %595 = vmatprep.subr.mxu0 0.0
    %596 = vmatpush1.xpose.msra.mxu0 0.0
    %597 = vmatprep.subr.mxu0 0.0
    %598 = vmatpush1.xpose.msra.mxu0 0.0
    %599 = vmatprep.subr.mxu0 0.0
    %600 = vmatpush1.xpose.msra.mxu0 0.0
    %601 = vmatprep.subr.mxu0 0.0
    %602 = vmatpush1.xpose.msra.mxu0 0.0
    %603 = vmatprep.subr.mxu0 0.0
    %604 = vmatpush1.xpose.msra.mxu0 0.0
    %605 = vmatprep.subr.mxu0 0.0
    %606 = vmatpush1.xpose.msra.mxu0 0.0
    %607 = vmatprep.mubr.f32.mxu0 0.0
    %608 = vmatmul.mubr.f32.gmra.mrb[0].mxu0 %v539
    %v609 = vpop.f32.mrb[0].mxu0
    %v610 = vadd.f32 0.0, %v609
    %v611 = vpop.f32.mrb[0].mxu0
    %612 = vdwg.mxu0
    %613 = vrot.lane.b32.xlu0 %v202, 112
    %v614 = vpop.permute.xlu0 %613
    %615 = vrot.lane.b32.xlu0 %v202, 80
    %v616 = vpop.permute.xlu0 %615
    %v617 = vsel %vm39, %v614, 0
    %v619 = vsel %vm39, %v616, 0
    %621 = vmatprep.subr.mxu0 0.0
    %622 = vmatpush1.xpose.msra.mxu0 %v619
    %623 = vmatprep.subr.mxu0 0.0
    %624 = vmatpush1.xpose.msra.mxu0 0.0
    %625 = vmatprep.subr.mxu0 0.0
    %626 = vmatpush1.xpose.msra.mxu0 0.0
    %627 = vmatprep.subr.mxu0 0.0
    %628 = vmatpush1.xpose.msra.mxu0 0.0
    %629 = vmatprep.subr.mxu0 0.0
    %630 = vmatpush1.xpose.msra.mxu0 0.0
    %631 = vmatprep.subr.mxu0 0.0
    %632 = vmatpush1.xpose.msra.mxu0 0.0
    %633 = vmatprep.subr.mxu0 0.0
    %634 = vmatpush1.xpose.msra.mxu0 0.0
    %635 = vmatprep.subr.mxu0 0.0
    %636 = vmatpush1.xpose.msra.mxu0 0.0
    %637 = vmatprep.subr.mxu0 0.0
    %638 = vmatpush1.xpose.msra.mxu0 0.0
    %639 = vmatprep.subr.mxu0 0.0
    %640 = vmatpush1.xpose.msra.mxu0 0.0
    %641 = vmatprep.subr.mxu0 0.0
    %642 = vmatpush1.xpose.msra.mxu0 0.0
    %643 = vmatprep.subr.mxu0 0.0
    %644 = vmatpush1.xpose.msra.mxu0 0.0
    %645 = vmatprep.subr.mxu0 0.0
    %646 = vmatpush1.xpose.msra.mxu0 0.0
    %647 = vmatprep.subr.mxu0 0.0
    %648 = vmatpush1.xpose.msra.mxu0 0.0
    %649 = vmatprep.subr.mxu0 0.0
    %650 = vmatpush1.xpose.msra.mxu0 0.0
    %651 = vmatprep.subr.mxu0 0.0
    %652 = vmatpush1.xpose.msra.mxu0 0.0
    %653 = vmatprep.subr.mxu0 0.0
    %654 = vmatpush1.xpose.msra.mxu0 0.0
    %655 = vmatprep.subr.mxu0 0.0
    %656 = vmatpush1.xpose.msra.mxu0 0.0
    %657 = vmatprep.subr.mxu0 0.0
    %658 = vmatpush1.xpose.msra.mxu0 0.0
    %659 = vmatprep.subr.mxu0 0.0
    %660 = vmatpush1.xpose.msra.mxu0 0.0
    %661 = vmatprep.subr.mxu0 0.0
    %662 = vmatpush1.xpose.msra.mxu0 0.0
    %663 = vmatprep.subr.mxu0 0.0
    %664 = vmatpush1.xpose.msra.mxu0 0.0
    %665 = vmatprep.subr.mxu0 0.0
    %666 = vmatpush1.xpose.msra.mxu0 0.0
    %667 = vmatprep.subr.mxu0 0.0
    %668 = vmatpush1.xpose.msra.mxu0 0.0
    %669 = vmatprep.subr.mxu0 0.0
    %670 = vmatpush1.xpose.msra.mxu0 0.0
    %671 = vmatprep.subr.mxu0 0.0
    %672 = vmatpush1.xpose.msra.mxu0 0.0
    %673 = vmatprep.subr.mxu0 0.0
    %674 = vmatpush1.xpose.msra.mxu0 0.0
    %675 = vmatprep.subr.mxu0 0.0
    %676 = vmatpush1.xpose.msra.mxu0 0.0
    %677 = vmatprep.subr.mxu0 0.0
    %678 = vmatpush1.xpose.msra.mxu0 0.0
    %679 = vmatprep.subr.mxu0 0.0
    %680 = vmatpush1.xpose.msra.mxu0 0.0
    %681 = vmatprep.subr.mxu0 0.0
    %682 = vmatpush1.xpose.msra.mxu0 0.0
    %683 = vmatprep.subr.mxu0 0.0
    %684 = vmatpush1.xpose.msra.mxu0 0.0
    %685 = vmatprep.mubr.f32.mxu0 0.0
    %686 = vmatmul.mubr.f32.gmra.mrb[0].mxu0 %v617
    %v687 = vpop.f32.mrb[0].mxu0
    %v688 = vadd.f32 0.0, %v687
    %v689 = vpop.f32.mrb[0].mxu0
    %690 = vdwg.mxu0
    %v691 = vmul.f32 %v610, 0.25
    %v692 = vmul.f32 %v688, 0.25
    %v693 = vsel %vm357, %v691, -inf
    %694 = vmax.xlane.f32.xlu0 %v693
    %v695 = vpop.xlane.xlu0 %694
    %v696 = vsel %vm357, %v692, -inf
    %697 = vmax.xlane.f32.xlu0 %v696
    %v698 = vpop.xlane.xlu0 %697
    %v699 = vsub.f32 %v691, %v695
    %v700 = vsub.f32 %v692, %v698
    %v701 = vmul.f32 %v699, 1.442695
    %v702 = vpow.pop %v701
    %v703 = vmul.f32 %v700, 1.442695
    %v704 = vpow.pop %v703
    %v705 = vsel %vm357, %v702, 0.0
    %706 = vadd.xlane.f32.xlu0 %v705
    %v707 = vpop.xlane.xlu0 %706
    %v708 = vsel %vm357, %v704, 0.0
    %709 = vadd.xlane.f32.xlu0 %v708
    %v710 = vpop.xlane.xlu0 %709
    %v711 = vrcp.pop %v707
    %v712 = vrcp.pop %v710
    %v713 = vmul.f32 %v702, %v711
    %v714 = vmul.f32 %v704, %v712
    %715 = vrot.lane.b32.xlu0 %v198, 48
    %v716 = vpop.permute.xlu0 %715
    %v718 = vsel %vm382, %v713, 0
    %v720 = vsel %vm116, %v716, 0
    %722 = vmatprep.subr.mxu0 0.0
    %723 = vmatpush1.msra.mxu0 %v720
    %724 = vmatprep.subr.mxu0 0.0
    %725 = vmatpush1.msra.mxu0 0.0
    %726 = vmatprep.subr.mxu0 0.0
    %727 = vmatpush1.msra.mxu0 0.0
    %728 = vmatprep.subr.mxu0 0.0
    %729 = vmatpush1.msra.mxu0 0.0
    %730 = vmatprep.subr.mxu0 0.0
    %731 = vmatpush1.msra.mxu0 0.0
    %732 = vmatprep.subr.mxu0 0.0
    %733 = vmatpush1.msra.mxu0 0.0
    %734 = vmatprep.subr.mxu0 0.0
    %735 = vmatpush1.msra.mxu0 0.0
    %736 = vmatprep.subr.mxu0 0.0
    %737 = vmatpush1.msra.mxu0 0.0
    %738 = vmatprep.subr.mxu0 0.0
    %739 = vmatpush1.msra.mxu0 0.0
    %740 = vmatprep.subr.mxu0 0.0
    %741 = vmatpush1.msra.mxu0 0.0
    %742 = vmatprep.subr.mxu0 0.0
    %743 = vmatpush1.msra.mxu0 0.0
    %744 = vmatprep.subr.mxu0 0.0
    %745 = vmatpush1.msra.mxu0 0.0
    %746 = vmatprep.subr.mxu0 0.0
    %747 = vmatpush1.msra.mxu0 0.0
    %748 = vmatprep.subr.mxu0 0.0
    %749 = vmatpush1.msra.mxu0 0.0
    %750 = vmatprep.subr.mxu0 0.0
    %751 = vmatpush1.msra.mxu0 0.0
    %752 = vmatprep.subr.mxu0 0.0
    %753 = vmatpush1.msra.mxu0 0.0
    %754 = vmatprep.subr.mxu0 0.0
    %755 = vmatpush1.msra.mxu0 0.0
    %756 = vmatprep.subr.mxu0 0.0
    %757 = vmatpush1.msra.mxu0 0.0
    %758 = vmatprep.subr.mxu0 0.0
    %759 = vmatpush1.msra.mxu0 0.0
    %760 = vmatprep.subr.mxu0 0.0
    %761 = vmatpush1.msra.mxu0 0.0
    %762 = vmatprep.subr.mxu0 0.0
    %763 = vmatpush1.msra.mxu0 0.0
    %764 = vmatprep.subr.mxu0 0.0
    %765 = vmatpush1.msra.mxu0 0.0
    %766 = vmatprep.subr.mxu0 0.0
    %767 = vmatpush1.msra.mxu0 0.0
    %768 = vmatprep.subr.mxu0 0.0
    %769 = vmatpush1.msra.mxu0 0.0
    %770 = vmatprep.subr.mxu0 0.0
    %771 = vmatpush1.msra.mxu0 0.0
    %772 = vmatprep.subr.mxu0 0.0
    %773 = vmatpush1.msra.mxu0 0.0
    %774 = vmatprep.subr.mxu0 0.0
    %775 = vmatpush1.msra.mxu0 0.0
    %776 = vmatprep.subr.mxu0 0.0
    %777 = vmatpush1.msra.mxu0 0.0
    %778 = vmatprep.subr.mxu0 0.0
    %779 = vmatpush1.msra.mxu0 0.0
    %780 = vmatprep.subr.mxu0 0.0
    %781 = vmatpush1.msra.mxu0 0.0
    %782 = vmatprep.subr.mxu0 0.0
    %783 = vmatpush1.msra.mxu0 0.0
    %784 = vmatprep.subr.mxu0 0.0
    %785 = vmatpush1.msra.mxu0 0.0
    %786 = vmatprep.mubr.f32.mxu0 0.0
    %787 = vmatmul.mubr.f32.gmra.mrb[0].mxu0 %v718
    %v788 = vpop.f32.mrb[0].mxu0
    %v789 = vadd.f32 0.0, %v788
    %v790 = vpop.f32.mrb[0].mxu0
    %791 = vdwg.mxu0
    %792 = vrot.lane.b32.xlu0 %v202, 48
    %v793 = vpop.permute.xlu0 %792
    %v795 = vsel %vm382, %v714, 0
    %v797 = vsel %vm116, %v793, 0
    %799 = vmatprep.subr.mxu0 0.0
    %800 = vmatpush1.msra.mxu0 %v797
    %801 = vmatprep.subr.mxu0 0.0
    %802 = vmatpush1.msra.mxu0 0.0
    %803 = vmatprep.subr.mxu0 0.0
    %804 = vmatpush1.msra.mxu0 0.0
    %805 = vmatprep.subr.mxu0 0.0
    %806 = vmatpush1.msra.mxu0 0.0
    %807 = vmatprep.subr.mxu0 0.0
    %808 = vmatpush1.msra.mxu0 0.0
    %809 = vmatprep.subr.mxu0 0.0
    %810 = vmatpush1.msra.mxu0 0.0
    %811 = vmatprep.subr.mxu0 0.0
    %812 = vmatpush1.msra.mxu0 0.0
    %813 = vmatprep.subr.mxu0 0.0
    %814 = vmatpush1.msra.mxu0 0.0
    %815 = vmatprep.subr.mxu0 0.0
    %816 = vmatpush1.msra.mxu0 0.0
    %817 = vmatprep.subr.mxu0 0.0
    %818 = vmatpush1.msra.mxu0 0.0
    %819 = vmatprep.subr.mxu0 0.0
    %820 = vmatpush1.msra.mxu0 0.0
    %821 = vmatprep.subr.mxu0 0.0
    %822 = vmatpush1.msra.mxu0 0.0
    %823 = vmatprep.subr.mxu0 0.0
    %824 = vmatpush1.msra.mxu0 0.0
    %825 = vmatprep.subr.mxu0 0.0
    %826 = vmatpush1.msra.mxu0 0.0
    %827 = vmatprep.subr.mxu0 0.0
    %828 = vmatpush1.msra.mxu0 0.0
    %829 = vmatprep.subr.mxu0 0.0
    %830 = vmatpush1.msra.mxu0 0.0
    %831 = vmatprep.subr.mxu0 0.0
    %832 = vmatpush1.msra.mxu0 0.0
    %833 = vmatprep.subr.mxu0 0.0
    %834 = vmatpush1.msra.mxu0 0.0
    %835 = vmatprep.subr.mxu0 0.0
    %836 = vmatpush1.msra.mxu0 0.0
    %837 = vmatprep.subr.mxu0 0.0
    %838 = vmatpush1.msra.mxu0 0.0
    %839 = vmatprep.subr.mxu0 0.0
    %840 = vmatpush1.msra.mxu0 0.0
    %841 = vmatprep.subr.mxu0 0.0
    %842 = vmatpush1.msra.mxu0 0.0
    %843 = vmatprep.subr.mxu0 0.0
    %844 = vmatpush1.msra.mxu0 0.0
    %845 = vmatprep.subr.mxu0 0.0
    %846 = vmatpush1.msra.mxu0 0.0
    %847 = vmatprep.subr.mxu0 0.0
    %848 = vmatpush1.msra.mxu0 0.0
    %849 = vmatprep.subr.mxu0 0.0
    %850 = vmatpush1.msra.mxu0 0.0
    %851 = vmatprep.subr.mxu0 0.0
    %852 = vmatpush1.msra.mxu0 0.0
    %853 = vmatprep.subr.mxu0 0.0
    %854 = vmatpush1.msra.mxu0 0.0
    %855 = vmatprep.subr.mxu0 0.0
    %856 = vmatpush1.msra.mxu0 0.0
    %857 = vmatprep.subr.mxu0 0.0
    %858 = vmatpush1.msra.mxu0 0.0
    %859 = vmatprep.subr.mxu0 0.0
    %860 = vmatpush1.msra.mxu0 0.0
    %861 = vmatprep.subr.mxu0 0.0
    %862 = vmatpush1.msra.mxu0 0.0
    %863 = vmatprep.mubr.f32.mxu0 0.0
    %864 = vmatmul.mubr.f32.gmra.mrb[0].mxu0 %v795
    %v865 = vpop.f32.mrb[0].mxu0
    %v866 = vadd.f32 0.0, %v865
    %v867 = vpop.f32.mrb[0].mxu0
    %868 = vdwg.mxu0
    %871 = vrot.lane.b32.xlu0 %v789, 16
    %v872 = vpop.permute.xlu0 %871
    %873 = vrot.lane.b32.xlu0 %v866, 16
    %v874 = vpop.permute.xlu0 %873
    %v877 = vsel %vm39, %v455, %v872
    %v878 = vsel %vm39, %v532, %v874
    %v879 = vld [vmem:[%s4] sm:$0xff]
    %v880 = vld [vmem:[%s4 + $0x8] sm:$0xff]
    %v881 = vld [vmem:[%s4 + $0x10] sm:$0xff]
    %v882 = vld [vmem:[%s4 + $0x18] sm:$0xff]
    %v883 = vlaneseq
    %v884 = vshrl.u32 %v883, 7
    %v885 = vsub.s32 6, %v884
    %v886 = vrot.slane %v30, %v885
    %v889 = vcombine.low %v877, %v878
    %v890 = vsel %vm127, %v889, 0
    %892 = vmatprep.subr.mxu0 0.0
    %893 = vmatpush1.msra.mxu0 %v879
    %894 = vmatprep.subr.mxu0 0.0
    %895 = vmatpush1.msra.mxu0 %v880
    %896 = vmatprep.subr.mxu0 0.0
    %897 = vmatpush1.msra.mxu0 %v881
    %898 = vmatprep.subr.mxu0 0.0
    %899 = vmatpush1.msra.mxu0 %v882
    %900 = vmatprep.subr.mxu0 0.0
    %901 = vmatpush1.msra.mxu0 0.0
    %902 = vmatprep.subr.mxu0 0.0
    %903 = vmatpush1.msra.mxu0 0.0
    %904 = vmatprep.subr.mxu0 0.0
    %905 = vmatpush1.msra.mxu0 0.0
    %906 = vmatprep.subr.mxu0 0.0
    %907 = vmatpush1.msra.mxu0 0.0
    %908 = vmatprep.subr.mxu0 0.0
    %909 = vmatpush1.msra.mxu0 0.0
    %910 = vmatprep.subr.mxu0 0.0
    %911 = vmatpush1.msra.mxu0 0.0
    %912 = vmatprep.subr.mxu0 0.0
    %913 = vmatpush1.msra.mxu0 0.0
    %914 = vmatprep.subr.mxu0 0.0
    %915 = vmatpush1.msra.mxu0 0.0
    %916 = vmatprep.subr.mxu0 0.0
    %917 = vmatpush1.msra.mxu0 0.0
    %918 = vmatprep.subr.mxu0 0.0
    %919 = vmatpush1.msra.mxu0 0.0
    %920 = vmatprep.subr.mxu0 0.0
    %921 = vmatpush1.msra.mxu0 0.0
    %922 = vmatprep.subr.mxu0 0.0
    %923 = vmatpush1.msra.mxu0 0.0
    %924 = vmatprep.subr.mxu0 0.0
    %925 = vmatpush1.msra.mxu0 0.0
    %926 = vmatprep.subr.mxu0 0.0
    %927 = vmatpush1.msra.mxu0 0.0
    %928 = vmatprep.subr.mxu0 0.0
    %929 = vmatpush1.msra.mxu0 0.0
    %930 = vmatprep.subr.mxu0 0.0
    %931 = vmatpush1.msra.mxu0 0.0
    %932 = vmatprep.subr.mxu0 0.0
    %933 = vmatpush1.msra.mxu0 0.0
    %934 = vmatprep.subr.mxu0 0.0
    %935 = vmatpush1.msra.mxu0 0.0
    %936 = vmatprep.subr.mxu0 0.0
    %937 = vmatpush1.msra.mxu0 0.0
    %938 = vmatprep.subr.mxu0 0.0
    %939 = vmatpush1.msra.mxu0 0.0
    %940 = vmatprep.subr.mxu0 0.0
    %941 = vmatpush1.msra.mxu0 0.0
    %942 = vmatprep.subr.mxu0 0.0
    %943 = vmatpush1.msra.mxu0 0.0
    %944 = vmatprep.subr.mxu0 0.0
    %945 = vmatpush1.msra.mxu0 0.0
    %946 = vmatprep.subr.mxu0 0.0
    %947 = vmatpush1.msra.mxu0 0.0
    %948 = vmatprep.subr.mxu0 0.0
    %949 = vmatpush1.msra.mxu0 0.0
    %950 = vmatprep.subr.mxu0 0.0
    %951 = vmatpush1.msra.mxu0 0.0
    %952 = vmatprep.subr.mxu0 0.0
    %953 = vmatpush1.msra.mxu0 0.0
    %954 = vmatprep.subr.mxu0 0.0
    %955 = vmatpush1.msra.mxu0 0.0
    %956 = vmatprep.mubr.f32.mxu0 0.0
    %957 = vmatmul.mubr.f32.gmra.mrb[0].mxu0 %v890
    %v958 = vpop.f32.mrb[0].mxu0
    %v959 = vadd.f32 %v886, %v958
    %v960 = vpop.f32.mrb[0].mxu0
    %961 = vdwg.mxu0
    %v962 = vadd.f32 %v118, %v959
    %v963 = vsel %vm127, %v962, 0.0
    %964 = vadd.xlane.f32.xlu0 %v963
    %v965 = vpop.xlane.xlu0 %964
    %v966 = vrcp.pop 32.0
    %v967 = vmul.f32 %v965, %v966
    %v968 = vsub.f32 %v962, %v967
    %v969 = vmul.f32 %v968, %v968
    %v970 = vsel %vm127, %v969, 0.0
    %971 = vadd.xlane.f32.xlu0 %v970
    %v972 = vpop.xlane.xlu0 %971
    %v973 = vmul.f32 %v972, %v966
    %v974 = vadd.f32 %v973, 1e-05
    %v975 = vrsqrt.pop %v974
    %v976 = vmul.f32 %v968, %v975
    %v977 = vlaneseq
    %v978 = vshrl.u32 %v977, 7
    %v979 = vsub.s32 7, %v978
    %v980 = vrot.slane %v30, %v979
    %v981 = vmul.f32 %v976, %v980
    %v982 = vlaneseq
    %v983 = vshrl.u32 %v982, 7
    %v984 = vsub.s32 0, %v983
    %v985 = vrot.slane %v31, %v984
    %v986 = vadd.f32 %v981, %v985
    %v987 = vld [vmem:[%s5] sm:$0xff]
    %v988 = vld [vmem:[%s5 + $0x8] sm:$0xff]
    %v989 = vld [vmem:[%s5 + $0x10] sm:$0xff]
    %v990 = vld [vmem:[%s5 + $0x18] sm:$0xff]
    %v991 = vlaneseq
    %v992 = vshrl.u32 %v991, 7
    %v993 = vsub.s32 1, %v992
    %v994 = vrot.slane %v31, %v993
    %v996 = vsel %vm127, %v986, 0
    %998 = vmatprep.subr.mxu0 0.0
    %999 = vmatpush1.msra.mxu0 %v987
    %1000 = vmatprep.subr.mxu0 0.0
    %1001 = vmatpush1.msra.mxu0 %v988
    %1002 = vmatprep.subr.mxu0 0.0
    %1003 = vmatpush1.msra.mxu0 %v989
    %1004 = vmatprep.subr.mxu0 0.0
    %1005 = vmatpush1.msra.mxu0 %v990
    %1006 = vmatprep.subr.mxu0 0.0
    %1007 = vmatpush1.msra.mxu0 0.0
    %1008 = vmatprep.subr.mxu0 0.0
    %1009 = vmatpush1.msra.mxu0 0.0
    %1010 = vmatprep.subr.mxu0 0.0
    %1011 = vmatpush1.msra.mxu0 0.0
    %1012 = vmatprep.subr.mxu0 0.0
    %1013 = vmatpush1.msra.mxu0 0.0
    %1014 = vmatprep.subr.mxu0 0.0
    %1015 = vmatpush1.msra.mxu0 0.0
    %1016 = vmatprep.subr.mxu0 0.0
    %1017 = vmatpush1.msra.mxu0 0.0
    %1018 = vmatprep.subr.mxu0 0.0
    %1019 = vmatpush1.msra.mxu0 0.0
    %1020 = vmatprep.subr.mxu0 0.0
    %1021 = vmatpush1.msra.mxu0 0.0
    %1022 = vmatprep.subr.mxu0 0.0
    %1023 = vmatpush1.msra.mxu0 0.0
    %1024 = vmatprep.subr.mxu0 0.0
    %1025 = vmatpush1.msra.mxu0 0.0
    %1026 = vmatprep.subr.mxu0 0.0
    %1027 = vmatpush1.msra.mxu0 0.0
    %1028 = vmatprep.subr.mxu0 0.0
    %1029 = vmatpush1.msra.mxu0 0.0
    %1030 = vmatprep.subr.mxu0 0.0
    %1031 = vmatpush1.msra.mxu0 0.0
    %1032 = vmatprep.subr.mxu0 0.0
    %1033 = vmatpush1.msra.mxu0 0.0
    %1034 = vmatprep.subr.mxu0 0.0
    %1035 = vmatpush1.msra.mxu0 0.0
    %1036 = vmatprep.subr.mxu0 0.0
    %1037 = vmatpush1.msra.mxu0 0.0
    %1038 = vmatprep.subr.mxu0 0.0
    %1039 = vmatpush1.msra.mxu0 0.0
    %1040 = vmatprep.subr.mxu0 0.0
    %1041 = vmatpush1.msra.mxu0 0.0
    %1042 = vmatprep.subr.mxu0 0.0
    %1043 = vmatpush1.msra.mxu0 0.0
    %1044 = vmatprep.subr.mxu0 0.0
    %1045 = vmatpush1.msra.mxu0 0.0
    %1046 = vmatprep.subr.mxu0 0.0
    %1047 = vmatpush1.msra.mxu0 0.0
    %1048 = vmatprep.subr.mxu0 0.0
    %1049 = vmatpush1.msra.mxu0 0.0
    %1050 = vmatprep.subr.mxu0 0.0
    %1051 = vmatpush1.msra.mxu0 0.0
    %1052 = vmatprep.subr.mxu0 0.0
    %1053 = vmatpush1.msra.mxu0 0.0
    %1054 = vmatprep.subr.mxu0 0.0
    %1055 = vmatpush1.msra.mxu0 0.0
    %1056 = vmatprep.subr.mxu0 0.0
    %1057 = vmatpush1.msra.mxu0 0.0
    %1058 = vmatprep.subr.mxu0 0.0
    %1059 = vmatpush1.msra.mxu0 0.0
    %1060 = vmatprep.subr.mxu0 0.0
    %1061 = vmatpush1.msra.mxu0 0.0
    %1062 = vmatprep.mubr.f32.mxu0 0.0
    %1063 = vmatmul.mubr.f32.gmra.mrb[0].mxu0 %v996
    %v1064 = vpop.f32.mrb[0].mxu0
    %v1065 = vadd.f32 %v994, %v1064
    %v1066 = vpop.f32.mrb[0].mxu0
    %1067 = vdwg.mxu0
    %v1068 = vmul.f32 %v1065, 0.5
    %v1069 = vmul.f32 %v1065, 0.70710677
    %v1070 = vand.u32 2147483647, %v1069
    %v1071 = vmul.f32 %v1070, 0.3275911
    %v1072 = vadd.f32 %v1071, 1.0
    %v1073 = vrcp.pop %v1072
    %v1074 = vmul.f32 1.0, %v1073
    %v1075 = vmul.f32 %v1074, 1.0614054
    %v1076 = vadd.f32 %v1075, -1.4531521
    %v1077 = vmul.f32 %v1076, %v1074
    %v1078 = vadd.f32 %v1077, 1.4214138
    %v1079 = vmul.f32 %v1078, %v1074
    %v1080 = vadd.f32 %v1079, -0.28449672
    %v1081 = vmul.f32 %v1080, %v1074
    %v1082 = vadd.f32 %v1081, 0.2548296
    %v1083 = vmul.f32 %v1082, %v1074
    %v1084 = vsub.f32 0.0, %v1070
    %v1085 = vmul.f32 %v1084, %v1070
    %v1086 = vmul.f32 %v1085, 1.442695
    %v1087 = vpow.pop %v1086
    %v1088 = vmul.f32 %v1083, %v1087
    %v1089 = vsub.f32 1.0, %v1088
    %vm1090 = vcmp.lt.f32.partialorder %v1069, 0.0
    %v1091 = vsub.f32 0.0, %v1089
    %v1092 = vsel %vm1090, %v1091, %v1089
    %v1093 = vadd.f32 %v1092, 1.0
    %v1094 = vmul.f32 %v1068, %v1093
    %v1095 = vld [vmem:[%s6] sm:$0xff]
    %v1096 = vld [vmem:[%s6 + $0x8] sm:$0xff]
    %v1097 = vld [vmem:[%s6 + $0x10] sm:$0xff]
    %v1098 = vld [vmem:[%s6 + $0x18] sm:$0xff]
    %v1099 = vld [vmem:[%s6 + $0x20] sm:$0xff]
    %v1100 = vld [vmem:[%s6 + $0x28] sm:$0xff]
    %v1101 = vld [vmem:[%s6 + $0x30] sm:$0xff]
    %v1102 = vld [vmem:[%s6 + $0x38] sm:$0xff]
    %v1103 = vlaneseq
    %v1104 = vshrl.u32 %v1103, 7
    %v1105 = vsub.s32 2, %v1104
    %v1106 = vrot.slane %v31, %v1105
    %vm1107 = vcmask 523264
    %v1109 = vsel %vm1107, %v1094, 0
    %1111 = vmatprep.subr.mxu0 0.0
    %1112 = vmatpush1.msra.mxu0 %v1095
    %1113 = vmatprep.subr.mxu0 0.0
    %1114 = vmatpush1.msra.mxu0 %v1096
    %1115 = vmatprep.subr.mxu0 0.0
    %1116 = vmatpush1.msra.mxu0 %v1097
    %1117 = vmatprep.subr.mxu0 0.0
    %1118 = vmatpush1.msra.mxu0 %v1098
    %1119 = vmatprep.subr.mxu0 0.0
    %1120 = vmatpush1.msra.mxu0 %v1099
    %1121 = vmatprep.subr.mxu0 0.0
    %1122 = vmatpush1.msra.mxu0 %v1100
    %1123 = vmatprep.subr.mxu0 0.0
    %1124 = vmatpush1.msra.mxu0 %v1101
    %1125 = vmatprep.subr.mxu0 0.0
    %1126 = vmatpush1.msra.mxu0 %v1102
    %1127 = vmatprep.subr.mxu0 0.0
    %1128 = vmatpush1.msra.mxu0 0.0
    %1129 = vmatprep.subr.mxu0 0.0
    %1130 = vmatpush1.msra.mxu0 0.0
    %1131 = vmatprep.subr.mxu0 0.0
    %1132 = vmatpush1.msra.mxu0 0.0
    %1133 = vmatprep.subr.mxu0 0.0
    %1134 = vmatpush1.msra.mxu0 0.0
    %1135 = vmatprep.subr.mxu0 0.0
    %1136 = vmatpush1.msra.mxu0 0.0
    %1137 = vmatprep.subr.mxu0 0.0
    %1138 = vmatpush1.msra.mxu0 0.0
    %1139 = vmatprep.subr.mxu0 0.0
    %1140 = vmatpush1.msra.mxu0 0.0
    %1141 = vmatprep.subr.mxu0 0.0
    %1142 = vmatpush1.msra.mxu0 0.0
    %1143 = vmatprep.subr.mxu0 0.0
    %1144 = vmatpush1.msra.mxu0 0.0
    %1145 = vmatprep.subr.mxu0 0.0
    %1146 = vmatpush1.msra.mxu0 0.0
    %1147 = vmatprep.subr.mxu0 0.0
    %1148 = vmatpush1.msra.mxu0 0.0
    %1149 = vmatprep.subr.mxu0 0.0
    %1150 = vmatpush1.msra.mxu0 0.0
    %1151 = vmatprep.subr.mxu0 0.0
    %1152 = vmatpush1.msra.mxu0 0.0
    %1153 = vmatprep.subr.mxu0 0.0
    %1154 = vmatpush1.msra.mxu0 0.0
    %1155 = vmatprep.subr.mxu0 0.0
    %1156 = vmatpush1.msra.mxu0 0.0
    %1157 = vmatprep.subr.mxu0 0.0
    %1158 = vmatpush1.msra.mxu0 0.0
    %1159 = vmatprep.subr.mxu0 0.0
    %1160 = vmatpush1.msra.mxu0 0.0
    %1161 = vmatprep.subr.mxu0 0.0
    %1162 = vmatpush1.msra.mxu0 0.0
    %1163 = vmatprep.subr.mxu0 0.0
    %1164 = vmatpush1.msra.mxu0 0.0
    %1165 = vmatprep.subr.mxu0 0.0
    %1166 = vmatpush1.msra.mxu0 0.0
    %1167 = vmatprep.subr.mxu0 0.0
    %1168 = vmatpush1.msra.mxu0 0.0
    %1169 = vmatprep.subr.mxu0 0.0
    %1170 = vmatpush1.msra.mxu0 0.0
    %1171 = vmatprep.subr.mxu0 0.0
    %1172 = vmatpush1.msra.mxu0 0.0
    %1173 = vmatprep.subr.mxu0 0.0
    %1174 = vmatpush1.msra.mxu0 0.0
    %1175 = vmatprep.mubr.f32.mxu0 0.0
    %1176 = vmatmul.mubr.f32.gmra.mrb[0].mxu0 %v1109
    %v1177 = vpop.f32.mrb[0].mxu0
    %v1178 = vadd.f32 %v1106, %v1177
    %v1179 = vpop.f32.mrb[0].mxu0
    %1180 = vdwg.mxu0
    %v1181 = vadd.f32 %v986, %v1178
    %v1182 = vsel %vm127, %v1181, 0.0
    %1183 = vadd.xlane.f32.xlu0 %v1182
    %v1184 = vpop.xlane.xlu0 %1183
    %v1185 = vmul.f32 %v1184, %v966
    %v1186 = vsub.f32 %v1181, %v1185
    %v1187 = vmul.f32 %v1186, %v1186
    %v1188 = vsel %vm127, %v1187, 0.0
    %1189 = vadd.xlane.f32.xlu0 %v1188
    %v1190 = vpop.xlane.xlu0 %1189
    %v1191 = vmul.f32 %v1190, %v966
    %v1192 = vadd.f32 %v1191, 1e-05
    %v1193 = vrsqrt.pop %v1192
    %v1194 = vmul.f32 %v1186, %v1193
    %v1195 = vlaneseq
    %v1196 = vshrl.u32 %v1195, 7
    %v1197 = vsub.s32 3, %v1196
    %v1198 = vrot.slane %v31, %v1197
    %v1199 = vmul.f32 %v1194, %v1198
    %v1200 = vlaneseq
    %v1201 = vshrl.u32 %v1200, 7
    %v1202 = vsub.s32 4, %v1201
    %v1203 = vrot.slane %v31, %v1202
    %v1204 = vadd.f32 %v1199, %v1203
    %v1206 = vcombine.high %v1204, %v1204
    %v1207 = vlaneseq
    %v1208 = vshrl.u32 %v1207, 7
    %v1209 = vsub.s32 0, %v1208
    %v1210 = vrot.slane %v1204, %v1209
    %v1211 = vlaneseq
    %v1212 = vshrl.u32 %v1211, 7
    %v1213 = vsub.s32 0, %v1212
    %v1214 = vrot.slane %v1206, %v1213
    %vm1215 = vcmask 1041409
    %v1216 = vsel %vm1215, %v1214, %v1210
    %v1218 = vlaneseq
    %v1219 = vshrl.u32 %v1218, 7
    %v1220 = vsub.s32 1, %v1219
    %v1221 = vrot.slane %v1204, %v1220
    %v1222 = vlaneseq
    %v1223 = vshrl.u32 %v1222, 7
    %v1224 = vsub.s32 1, %v1223
    %v1225 = vrot.slane %v1206, %v1224
    %v1226 = vsel %vm1215, %v1225, %v1221
    %1227 = vrot.lane.b32.xlu0 %v1226, 32
    %v1228 = vpop.permute.xlu0 %1227
    %v1230 = vlaneseq
    %v1231 = vshrl.u32 %v1230, 7
    %v1232 = vsub.s32 2, %v1231
    %v1233 = vrot.slane %v1204, %v1232
    %v1234 = vlaneseq
    %v1235 = vshrl.u32 %v1234, 7
    %v1236 = vsub.s32 2, %v1235
    %v1237 = vrot.slane %v1206, %v1236
    %v1238 = vsel %vm1215, %v1237, %v1233
    %1239 = vrot.lane.b32.xlu0 %v1238, 64
    %v1240 = vpop.permute.xlu0 %1239
    %v1242 = vlaneseq
    %v1243 = vshrl.u32 %v1242, 7
    %v1244 = vsub.s32 3, %v1243
    %v1245 = vrot.slane %v1204, %v1244
    %v1246 = vlaneseq
    %v1247 = vshrl.u32 %v1246, 7
    %v1248 = vsub.s32 3, %v1247
    %v1249 = vrot.slane %v1206, %v1248
    %v1250 = vsel %vm1215, %v1249, %v1245
    %1251 = vrot.lane.b32.xlu0 %v1250, 96
    %v1252 = vpop.permute.xlu0 %1251
    %v1254 = vsel %vm127, %v1216, %v1228
    %v1255 = vsel %vm1107, %v1254, %v1240
    %vm1256 = vcmask 785408
    %v1257 = vsel %vm1256, %v1255, %v1252
    %v1258 = vld [vmem:[%s7] sm:$0xff]
    %v1259 = vld [vmem:[%s7 + $0x8] sm:$0xff]
    %v1260 = vld [vmem:[%s7 + $0x10] sm:$0xff]
    %v1261 = vld [vmem:[%s7 + $0x18] sm:$0xff]
    %v1262 = vld [vmem:[%s7 + $0x20] sm:$0xff]
    %v1263 = vld [vmem:[%s7 + $0x28] sm:$0xff]
    %v1264 = vld [vmem:[%s7 + $0x30] sm:$0xff]
    %v1265 = vld [vmem:[%s7 + $0x38] sm:$0xff]
    %v1266 = vld [vmem:[%s7 + $0x40] sm:$0xff]
    %v1267 = vld [vmem:[%s7 + $0x48] sm:$0xff]
    %v1268 = vld [vmem:[%s7 + $0x50] sm:$0xff]
    %v1269 = vld [vmem:[%s7 + $0x58] sm:$0xff]
    %v1270 = vld [vmem:[%s7 + $0x60] sm:$0xff]
    %v1271 = vld [vmem:[%s7 + $0x68] sm:$0xff]
    %v1272 = vld [vmem:[%s7 + $0x70] sm:$0xff]
    %v1273 = vld [vmem:[%s7 + $0x78] sm:$0xff]
    %v1274 = vlaneseq
    %v1275 = vshrl.u32 %v1274, 7
    %v1276 = vsub.s32 5, %v1275
    %v1277 = vrot.slane %v31, %v1276
    %1278 = vmatprep.subr.mxu0 0.0
    %1279 = vmatpush1.msra.mxu0 %v1258
    %1280 = vmatprep.subr.mxu0 0.0
    %1281 = vmatpush1.msra.mxu0 %v1259
    %1282 = vmatprep.subr.mxu0 0.0
    %1283 = vmatpush1.msra.mxu0 %v1260
    %1284 = vmatprep.subr.mxu0 0.0
    %1285 = vmatpush1.msra.mxu0 %v1261
    %1286 = vmatprep.subr.mxu0 0.0
    %1287 = vmatpush1.msra.mxu0 %v1262
    %1288 = vmatprep.subr.mxu0 0.0
    %1289 = vmatpush1.msra.mxu0 %v1263
    %1290 = vmatprep.subr.mxu0 0.0
    %1291 = vmatpush1.msra.mxu0 %v1264
    %1292 = vmatprep.subr.mxu0 0.0
    %1293 = vmatpush1.msra.mxu0 %v1265
    %1294 = vmatprep.subr.mxu0 0.0
    %1295 = vmatpush1.msra.mxu0 %v1266
    %1296 = vmatprep.subr.mxu0 0.0
    %1297 = vmatpush1.msra.mxu0 %v1267
    %1298 = vmatprep.subr.mxu0 0.0
    %1299 = vmatpush1.msra.mxu0 %v1268
    %1300 = vmatprep.subr.mxu0 0.0
    %1301 = vmatpush1.msra.mxu0 %v1269
    %1302 = vmatprep.subr.mxu0 0.0
    %1303 = vmatpush1.msra.mxu0 %v1270
    %1304 = vmatprep.subr.mxu0 0.0
    %1305 = vmatpush1.msra.mxu0 %v1271
    %1306 = vmatprep.subr.mxu0 0.0
    %1307 = vmatpush1.msra.mxu0 %v1272
    %1308 = vmatprep.subr.mxu0 0.0
    %1309 = vmatpush1.msra.mxu0 %v1273
    %1310 = vmatprep.subr.mxu0 0.0
    %1311 = vmatpush1.msra.mxu0 0.0
    %1312 = vmatprep.subr.mxu0 0.0
    %1313 = vmatpush1.msra.mxu0 0.0
    %1314 = vmatprep.subr.mxu0 0.0
    %1315 = vmatpush1.msra.mxu0 0.0
    %1316 = vmatprep.subr.mxu0 0.0
    %1317 = vmatpush1.msra.mxu0 0.0
    %1318 = vmatprep.subr.mxu0 0.0
    %1319 = vmatpush1.msra.mxu0 0.0
    %1320 = vmatprep.subr.mxu0 0.0
    %1321 = vmatpush1.msra.mxu0 0.0
    %1322 = vmatprep.subr.mxu0 0.0
    %1323 = vmatpush1.msra.mxu0 0.0
    %1324 = vmatprep.subr.mxu0 0.0
    %1325 = vmatpush1.msra.mxu0 0.0
    %1326 = vmatprep.subr.mxu0 0.0
    %1327 = vmatpush1.msra.mxu0 0.0
    %1328 = vmatprep.subr.mxu0 0.0
    %1329 = vmatpush1.msra.mxu0 0.0
    %1330 = vmatprep.subr.mxu0 0.0
    %1331 = vmatpush1.msra.mxu0 0.0
    %1332 = vmatprep.subr.mxu0 0.0
    %1333 = vmatpush1.msra.mxu0 0.0
    %1334 = vmatprep.subr.mxu0 0.0
    %1335 = vmatpush1.msra.mxu0 0.0
    %1336 = vmatprep.subr.mxu0 0.0
    %1337 = vmatpush1.msra.mxu0 0.0
    %1338 = vmatprep.subr.mxu0 0.0
    %1339 = vmatpush1.msra.mxu0 0.0
    %1340 = vmatprep.subr.mxu0 0.0
    %1341 = vmatpush1.msra.mxu0 0.0
    %1342 = vmatprep.mubr.f32.mxu0 0.0
    %1343 = vmatmul.mubr.f32.gmra.mrb[0].mxu0 %v1257
    %v1344 = vpop.f32.mrb[0].mxu0
    %v1345 = vadd.f32 %v1277, %v1344
    %v1346 = vpop.f32.mrb[0].mxu0
    %1347 = vdwg.mxu0
    %vm1348 = vcmask 58368
    %1349 = vst.msk [vmem:[#allocation2] sm:$0x3] %vm1348, %v1345
    // Predicated region
    $region34: #{patchtst_forward.1} parent=1 // pred_check
      _
    $region35: #{patchtst_forward.1} parent=1 // pred_check_branch
      %1351 = sbr.rel (0) target = $region37
    $region36: #{patchtst_forward.1} parent=1 // pred_region
      %s1353 = ssub.s32 32, 32
      %1354 = vsyncadd [#allocation3], %s1353
      %s1356 = sshll.u32 [#allocation2], 4
      %s1357 = int_to_ptr.vmem [resolvable:$true] %s1356
      %1359 = dma.vmem_to_hbm [thread:$0]  %s1357, 32, %s8, [#allocation3]
    $region37: #{patchtst_forward.1} parent=1 // pred_fallthru
      _
    // Predicated region
    $region38: #{patchtst_forward.1} parent=1 // pred_check
      _
    $region39: #{patchtst_forward.1} parent=1 // pred_check_branch
      %1361 = sbr.rel (0) target = $region41
    $region40: #{patchtst_forward.1} parent=1 // pred_region
      %1362 = dma.done [#allocation3], 32
    $region41: #{patchtst_forward.1} parent=1 // pred_fallthru
      _
    %1363 = vsyncpa [#allocation3], 1

</llo_original>
